<compile_context>
chip_gen: v6e
topology: v6e:2x2x1
jax: 0.10.0
libtpu: 0.0.40
codegen_flags: <defaults>
</compile_context>

<pallas_src>
import math

import jax
import jax.numpy as jnp
from jax.experimental import pallas as pl
from jax.experimental.pallas import tpu as pltpu


# ---------------------------------------------------------------------------
# VMEM budgeting / tile selection
# ---------------------------------------------------------------------------
_VMEM_LIMIT_BYTES = 64 * 1024 * 1024   # raised above the 16/32 MiB scoped default
_TILE_VMEM_BUDGET = 24 * 1024 * 1024   # target for double-buffered blocks (headroom)


def _choose_row_tile(m, per_row_bytes, fixed_bytes, max_tile=1024,
                     want_multi_step=True):
    """Largest row tile whose double-buffered blocks fit the VMEM budget."""
    tm = min(m, max_tile)
    while tm > 8 and fixed_bytes + 2 * tm * per_row_bytes > _TILE_VMEM_BUDGET:
        tm = (tm + 1) // 2
    # v7x megacore: give both TensorCores work on the parallel axis.
    if want_multi_step and pl.cdiv(m, tm) < 2 and m > 8:
        tm = (m + 1) // 2
    if tm < m:
        tm = max(8, (tm // 8) * 8)      # (8,128) block-shape rule on sublane dim
    else:
        tm = m                          # full dim is always legal
    return tm


# ---------------------------------------------------------------------------
# Kernel A: fused Q/K/V projections, head-major bf16 outputs
# ---------------------------------------------------------------------------
def _proj_heads(x_bf16, w_ref, b_ref, o_ref, n_head):
    # w_ref: (n_head, d_model, dh) bf16, b_ref: (n_head, 1, dh) bf16
    for h in range(n_head):
        y = jnp.dot(x_bf16, w_ref[h], preferred_element_type=jnp.float32)
        o_ref[h] = (y + b_ref[h]).astype(o_ref.dtype)


def _make_qkv_kernel(n_head, shared):
    def kernel(*refs):
        if shared:
            (x_ref, wq, bq, wk, bk, wv, bv, qo, ko, vo) = refs
            x = x_ref[...].astype(jnp.bfloat16)
            xq = xk = xv = x
        else:
            (xq_ref, xk_ref, xv_ref, wq, bq, wk, bk, wv, bv, qo, ko, vo) = refs
            xq = xq_ref[...].astype(jnp.bfloat16)
            xk = xk_ref[...].astype(jnp.bfloat16)
            xv = xv_ref[...].astype(jnp.bfloat16)
        _proj_heads(xq, wq, bq, qo, n_head)
        _proj_heads(xk, wk, bk, ko, n_head)
        _proj_heads(xv, wv, bv, vo, n_head)
    return kernel


def fused_qkv_projection(xq, xk, xv, p, *, shared):
    m, d_model = xq.shape
    n_head, d_k, d_v = p["n_head"], p["d_k"], p["d_v"]

    per_row = ((1 if shared else 3) * d_model * 4          # f32 activation reads
               + 2 * (2 * n_head * d_k + n_head * d_v))    # bf16 q/k/v writes
    fixed = 4 * int(p["w_qs"].size + p["w_ks"].size + p["w_vs"].size
                    + p["b_qs"].size + p["b_ks"].size + p["b_vs"].size)
    tm = _choose_row_tile(m, per_row, fixed)
    grid = (pl.cdiv(m, tm),)

    x_spec = pl.BlockSpec((tm, d_model), lambda i: (i, 0))
    wk_spec = pl.BlockSpec((n_head, d_model, d_k), lambda i: (0, 0, 0))
    bk_spec = pl.BlockSpec((n_head, 1, d_k), lambda i: (0, 0, 0))
    wv_spec = pl.BlockSpec((n_head, d_model, d_v), lambda i: (0, 0, 0))
    bv_spec = pl.BlockSpec((n_head, 1, d_v), lambda i: (0, 0, 0))

    in_specs = (([x_spec] if shared else [x_spec, x_spec, x_spec])
                + [wk_spec, bk_spec, wk_spec, bk_spec, wv_spec, bv_spec])
    inputs = (((xq,) if shared else (xq, xk, xv))
              + (p["w_qs"], p["b_qs"], p["w_ks"], p["b_ks"], p["w_vs"], p["b_vs"]))

    flops = 2 * m * d_model * n_head * (2 * d_k + d_v)
    bytes_acc = ((1 if shared else 3) * 4 * m * d_model
                 + fixed // 2
                 + 2 * m * n_head * (2 * d_k + d_v))

    return pl.pallas_call(
        _make_qkv_kernel(n_head, shared),
        out_shape=(jax.ShapeDtypeStruct((n_head, m, d_k), jnp.bfloat16),
                   jax.ShapeDtypeStruct((n_head, m, d_k), jnp.bfloat16),
                   jax.ShapeDtypeStruct((n_head, m, d_v), jnp.bfloat16)),
        grid=grid,
        in_specs=in_specs,
        out_specs=(pl.BlockSpec((n_head, tm, d_k), lambda i: (0, i, 0)),
                   pl.BlockSpec((n_head, tm, d_k), lambda i: (0, i, 0)),
                   pl.BlockSpec((n_head, tm, d_v), lambda i: (0, i, 0))),
        compiler_params=pltpu.CompilerParams(
            dimension_semantics=("parallel",),
            vmem_limit_bytes=_VMEM_LIMIT_BYTES),
        cost_estimate=pl.CostEstimate(flops=flops, transcendentals=0,
                                      bytes_accessed=bytes_acc),
    )(*inputs)


def _make_proj_kernel(n_head):
    def kernel(x_ref, w_ref, b_ref, o_ref):
        _proj_heads(x_ref[...].astype(jnp.bfloat16), w_ref, b_ref, o_ref, n_head)
    return kernel


def _single_projection(x, w_hm, b_hm):
    # Fallback path when len_q != len_k (different flattened row counts).
    m, d_model = x.shape
    n_head, _, dh = w_hm.shape
    per_row = d_model * 4 + n_head * dh * 2
    fixed = 4 * int(w_hm.size + b_hm.size)
    tm = _choose_row_tile(m, per_row, fixed)
    grid = (pl.cdiv(m, tm),)
    return pl.pallas_call(
        _make_proj_kernel(n_head),
        out_shape=jax.ShapeDtypeStruct((n_head, m, dh), jnp.bfloat16),
        grid=grid,
        in_specs=[pl.BlockSpec((tm, d_model), lambda i: (i, 0)),
                  pl.BlockSpec((n_head, d_model, dh), lambda i: (0, 0, 0)),
                  pl.BlockSpec((n_head, 1, dh), lambda i: (0, 0, 0))],
        out_specs=pl.BlockSpec((n_head, tm, dh), lambda i: (0, i, 0)),
        compiler_params=pltpu.CompilerParams(
            dimension_semantics=("parallel",),
            vmem_limit_bytes=_VMEM_LIMIT_BYTES),
        cost_estimate=pl.CostEstimate(
            flops=2 * m * d_model * n_head * dh, transcendentals=0,
            bytes_accessed=4 * m * d_model + fixed // 2 + 2 * m * n_head * dh),
    )(x, w_hm, b_hm)


# ---------------------------------------------------------------------------
# Kernel B: attention + fc + residual + LayerNorm (fused)
# ---------------------------------------------------------------------------
def _make_attn_out_kernel(n_head, d_v, with_attn, ln_eps=1e-5):
    qk_dims = (((1,), (1,)), ((), ()))   # q @ k^T (contract last dims)

    def kernel(q_ref, k_ref, v_ref, res_ref, wfc_ref, bfc_ref, g_ref, beta_ref,
               o_ref, *rest):
        if with_attn:
            attn_ref, ctx_ref = rest
        else:
            (ctx_ref,) = rest

        for h in range(n_head):              # static unroll; leading-axis index
            qh = q_ref[h]                    # (tq, d_k)  bf16, Q pre-scaled
            s = jax.lax.dot_general(qh, k_ref[h], qk_dims,
                                    preferred_element_type=jnp.float32)
            s = s - jnp.max(s, axis=-1, keepdims=True)
            e = jnp.exp(s)
            prob = e * pl.reciprocal(jnp.sum(e, axis=-1, keepdims=True),
                                     approx=True)
            if with_attn:
                attn_ref[h] = prob.astype(attn_ref.dtype)
            ctx_ref[:, h * d_v:(h + 1) * d_v] = jnp.dot(
                prob.astype(jnp.bfloat16), v_ref[h],
                preferred_element_type=jnp.float32).astype(ctx_ref.dtype)

        # fc + residual + LayerNorm on the lane-dense context block
        y = jnp.dot(ctx_ref[...], wfc_ref[...],
                    preferred_element_type=jnp.float32)
        y = y + bfc_ref[...] + res_ref[...]
        mu = jnp.mean(y, axis=-1, keepdims=True)
        var = jnp.mean(jnp.square(y - mu), axis=-1, keepdims=True)
        yn = (y - mu) * jax.lax.rsqrt(var + ln_eps)
        o_ref[...] = (yn * g_ref[...] + beta_ref[...]).astype(o_ref.dtype)

    return kernel


def attention_output_fused(q4, k4, v4, residual, p, *, return_attn):
    n_head, d_k, d_v, d_model = p["n_head"], p["d_k"], p["d_v"], p["d_model"]
    _, sz_b, len_q, _ = q4.shape
    len_k = k4.shape[2]

    per_row = (n_head * d_k * 2            # q block (bf16)
               + 2 * d_model * 4           # residual in + output out (f32)
               + n_head * d_v * 2          # ctx scratch
               + (n_head * len_k * 2 if return_attn else 0))
    fixed = (4 * n_head * len_k * (d_k + d_v)     # K/V blocks, 2-buffered bf16
             + 4 * n_head * d_v * d_model)        # resident fc weight
    tq = _choose_row_tile(len_q, per_row, fixed, max_tile=512,
                          want_multi_step=(sz_b < 2))
    grid = (sz_b, pl.cdiv(len_q, tq))

    o_struct = jax.ShapeDtypeStruct((sz_b, len_q, d_model), jnp.float32)
    o_spec = pl.BlockSpec((None, tq, d_model), lambda b, i: (b, i, 0))
    if return_attn:
        # Probabilities emitted in bf16 (halves HBM writeback / VMEM on v7x).
        out_shape = (o_struct,
                     jax.ShapeDtypeStruct((n_head, sz_b, len_q, len_k),
                                          jnp.bfloat16))
        out_specs = (o_spec,
                     pl.BlockSpec((n_head, None, tq, len_k),
                                  lambda b, i: (0, b, i, 0)))
    else:
        out_shape = o_struct
        out_specs = o_spec

    flops = (2 * sz_b * n_head * len_q * len_k * (d_k + d_v)
             + 2 * sz_b * len_q * n_head * d_v * d_model)
    bytes_acc = (2 * int(q4.size + k4.size + v4.size)
                 + 4 * int(residual.size) + 2 * int(p["w_fc"].size)
                 + 4 * sz_b * len_q * d_model
                 + (2 * n_head * sz_b * len_q * len_k if return_attn else 0))

    res = pl.pallas_call(
        _make_attn_out_kernel(n_head, d_v, return_attn),
        out_shape=out_shape,
        grid=grid,
        in_specs=[
            pl.BlockSpec((n_head, None, tq, d_k), lambda b, i: (0, b, i, 0)),
            pl.BlockSpec((n_head, None, len_k, d_k), lambda b, i: (0, b, 0, 0)),
            pl.BlockSpec((n_head, None, len_k, d_v), lambda b, i: (0, b, 0, 0)),
            pl.BlockSpec((None, tq, d_model), lambda b, i: (b, i, 0)),
            pl.BlockSpec((n_head * d_v, d_model), lambda b, i: (0, 0)),
            pl.BlockSpec((1, d_model), lambda b, i: (0, 0)),
            pl.BlockSpec((1, d_model), lambda b, i: (0, 0)),
            pl.BlockSpec((1, d_model), lambda b, i: (0, 0)),
        ],
        out_specs=out_specs,
        scratch_shapes=[pltpu.VMEM((tq, n_head * d_v), jnp.bfloat16)],
        compiler_params=pltpu.CompilerParams(
            dimension_semantics=("parallel", "parallel"),
            vmem_limit_bytes=_VMEM_LIMIT_BYTES),
        cost_estimate=pl.CostEstimate(
            flops=flops,
            transcendentals=sz_b * n_head * len_q * len_k,
            bytes_accessed=bytes_acc),
    )(q4, k4, v4, residual, p["w_fc"], p["b_fc"], p["ln_gamma"], p["ln_beta"])

    if return_attn:
        return res            # (output, attn)
    return res, None


# ---------------------------------------------------------------------------
# Parameter preparation (done once, not per forward call)
# ---------------------------------------------------------------------------
def prepare_mha_params(raw, n_head, d_model, d_k, d_v):
    inv_t = 1.0 / math.sqrt(float(d_k))   # folded into Q projection

    def head_major(w, dh):
        return w.reshape(d_model, n_head, dh).transpose(1, 0, 2)

    return {
        "n_head": n_head, "d_model": d_model, "d_k": d_k, "d_v": d_v,
        "w_qs": (head_major(raw["w_qs"], d_k) * inv_t).astype(jnp.bfloat16),
        "b_qs": (raw["b_qs"].reshape(n_head, 1, d_k) * inv_t).astype(jnp.bfloat16),
        "w_ks": head_major(raw["w_ks"], d_k).astype(jnp.bfloat16),
        "b_ks": raw["b_ks"].reshape(n_head, 1, d_k).astype(jnp.bfloat16),
        "w_vs": head_major(raw["w_vs"], d_v).astype(jnp.bfloat16),
        "b_vs": raw["b_vs"].reshape(n_head, 1, d_v).astype(jnp.bfloat16),
        "w_fc": raw["w_fc"].astype(jnp.bfloat16),
        "b_fc": raw["b_fc"].astype(jnp.float32),
        "ln_gamma": raw["ln_gamma"].astype(jnp.float32),
        "ln_beta": raw["ln_beta"].astype(jnp.float32),
    }


# ---------------------------------------------------------------------------
# MultiHeadAttention forward
# ---------------------------------------------------------------------------
def multi_head_attention(p, q, k, v, *, return_attn=False):
    n_head, d_k, d_v, d_model = p["n_head"], p["d_k"], p["d_v"], p["d_model"]
    sz_b, len_q, _ = q.shape
    _, len_k, _ = k.shape
    _, len_v, _ = v.shape

    xq = q.reshape(sz_b * len_q, d_model)
    xk = k.reshape(sz_b * len_k, d_model)
    xv = v.reshape(sz_b * len_v, d_model)

    if (q is k) and (k is v):
        # self-attention: DMA the activation rows once, not three times
        q_p, k_p, v_p = fused_qkv_projection(xq, None, None, p, shared=True)
    elif len_q == len_k == len_v:
        q_p, k_p, v_p = fused_qkv_projection(xq, xk, xv, p, shared=False)
    else:
        q_p = _single_projection(xq, p["w_qs"], p["b_qs"])
        k_p = _single_projection(xk, p["w_ks"], p["b_ks"])
        v_p = _single_projection(xv, p["w_vs"], p["b_vs"])

    # free (contiguity-preserving) reshapes to head-major 4D
    q4 = q_p.reshape(n_head, sz_b, len_q, d_k)
    k4 = k_p.reshape(n_head, sz_b, len_k, d_k)
    v4 = v_p.reshape(n_head, sz_b, len_k, d_v)

    output, attn = attention_output_fused(q4, k4, v4, q, p,
                                          return_attn=return_attn)
    if return_attn:
        attn = attn.reshape(n_head * sz_b, len_q, len_k)
    return output, attn


def init_params(key, n_head, d_model, d_k, d_v):
    ks = jax.random.split(key, 8)
    std_qk = math.sqrt(2.0 / (d_model + d_k))
    std_v = math.sqrt(2.0 / (d_model + d_v))
    std_fc = math.sqrt(2.0 / (n_head * d_v + d_model))
    return {
        "w_qs": jax.random.normal(ks[0], (d_model, n_head * d_k), jnp.float32) * std_qk,
        "b_qs": jax.random.normal(ks[1], (1, n_head * d_k), jnp.float32) * 0.01,
        "w_ks": jax.random.normal(ks[2], (d_model, n_head * d_k), jnp.float32) * std_qk,
        "b_ks": jax.random.normal(ks[3], (1, n_head * d_k), jnp.float32) * 0.01,
        "w_vs": jax.random.normal(ks[4], (d_model, n_head * d_v), jnp.float32) * std_v,
        "b_vs": jax.random.normal(ks[5], (1, n_head * d_v), jnp.float32) * 0.01,
        "w_fc": jax.random.normal(ks[6], (n_head * d_v, d_model), jnp.float32) * std_fc,
        "b_fc": jax.random.normal(ks[7], (1, d_model), jnp.float32) * 0.01,
        "ln_gamma": jnp.ones((1, d_model), jnp.float32),
        "ln_beta": jnp.zeros((1, d_model), jnp.float32),
    }


if __name__ == "__main__":
    n_head, d_model, d_k, d_v = 4, 32, 8, 8
    bsz, seq = 2, 8

    key = jax.random.PRNGKey(0)
    k_params, k_q, k_k, k_v = jax.random.split(key, 4)
    raw_params = init_params(k_params, n_head, d_model, d_k, d_v)
    params = prepare_mha_params(raw_params, n_head, d_model, d_k, d_v)

    q = jax.random.normal(k_q, (bsz, seq, d_model), jnp.float32)
    k = jax.random.normal(k_k, (bsz, seq, d_model), jnp.float32)
    v = jax.random.normal(k_v, (bsz, seq, d_model), jnp.float32)

    output, attn = multi_head_attention(params, q, k, v, return_attn=True)
    jax.block_until_ready((output, attn))

    assert output.shape == (bsz, seq, d_model)
    assert attn.shape == (n_head * bsz, seq, seq)

    # pure-JAX f32 reference (kernel uses bf16 intermediates + approx recip,
    # tolerances set accordingly)
    def ref_forward(p, q, k, v):
        qp = q.reshape(-1, d_model) @ p["w_qs"] + p["b_qs"]
        kp = k.reshape(-1, d_model) @ p["w_ks"] + p["b_ks"]
        vp = v.reshape(-1, d_model) @ p["w_vs"] + p["b_vs"]
        qh = qp.reshape(bsz, seq, n_head, d_k).transpose(2, 0, 1, 3).reshape(-1, seq, d_k)
        kh = kp.reshape(bsz, seq, n_head, d_k).transpose(2, 0, 1, 3).reshape(-1, seq, d_k)
        vh = vp.reshape(bsz, seq, n_head, d_v).transpose(2, 0, 1, 3).reshape(-1, seq, d_v)
        s = jnp.einsum("bqd,bkd->bqk", qh, kh) / (d_k ** 0.5)
        pr = jax.nn.softmax(s, axis=-1)
        oh = jnp.einsum("bqk,bkd->bqd", pr, vh)
        o = oh.reshape(n_head, bsz, seq, d_v).transpose(1, 2, 0, 3).reshape(bsz, seq, -1)
        o = o @ p["w_fc"] + p["b_fc"]
        y = o + q
        mu = y.mean(-1, keepdims=True)
        var = ((y - mu) ** 2).mean(-1, keepdims=True)
        yn = (y - mu) / jnp.sqrt(var + 1e-5)
        return yn * p["ln_gamma"] + p["ln_beta"], pr

    ref_out, ref_attn = ref_forward(raw_params, q, k, v)
    assert jnp.allclose(output, ref_out, atol=6e-2, rtol=6e-2), (
        float(jnp.max(jnp.abs(output - ref_out))))
    assert jnp.allclose(attn.astype(jnp.float32), ref_attn, atol=3e-2, rtol=3e-2), (
        float(jnp.max(jnp.abs(attn.astype(jnp.float32) - ref_attn))))

    # also exercise the shared-activation (self-attention) fast path
    out_self, _ = multi_head_attention(params, q, q, q, return_attn=False)
    jax.block_until_ready(out_self)
    ref_self, _ = ref_forward(raw_params, q, q, q)
    assert jnp.allclose(out_self, ref_self, atol=6e-2, rtol=6e-2), (
        float(jnp.max(jnp.abs(out_self - ref_self))))

    print("KERNEL_OK")
</pallas_src>

<mosaic_0001>
module attributes {stable_mosaic.version = 11 : i64} {
  func.func @kernel(%arg0: i32, %arg1: memref<8x32xf32, #tpu.memory_space<vmem>>, %arg2: memref<8x32xf32, #tpu.memory_space<vmem>>, %arg3: memref<8x32xf32, #tpu.memory_space<vmem>>, %arg4: memref<4x32x8xbf16, #tpu.memory_space<vmem>>, %arg5: memref<4x1x8xbf16, #tpu.memory_space<vmem>>, %arg6: memref<4x32x8xbf16, #tpu.memory_space<vmem>>, %arg7: memref<4x1x8xbf16, #tpu.memory_space<vmem>>, %arg8: memref<4x32x8xbf16, #tpu.memory_space<vmem>>, %arg9: memref<4x1x8xbf16, #tpu.memory_space<vmem>>, %arg10: memref<4x8x8xbf16, #tpu.memory_space<vmem>>, %arg11: memref<4x8x8xbf16, #tpu.memory_space<vmem>>, %arg12: memref<4x8x8xbf16, #tpu.memory_space<vmem>>) attributes {dimension_semantics = [#tpu.dimension_semantics<parallel>], iteration_bounds = array<i64: 2>, scalar_prefetch = 0 : i64, scratch_operands = 0 : i64, tpu.core_type = #tpu.core_type<tc>, window_params = [{transform_indices = @transform_0, window_bounds = array<i64: 8, 32>}, {transform_indices = @transform_1, window_bounds = array<i64: 8, 32>}, {transform_indices = @transform_2, window_bounds = array<i64: 8, 32>}, {pipeline_mode = #tpu.pipeline_mode<synchronous>, transform_indices = @transform_3, window_bounds = array<i64: 4, 32, 8>}, {pipeline_mode = #tpu.pipeline_mode<synchronous>, transform_indices = @transform_4, window_bounds = array<i64: 4, 1, 8>}, {pipeline_mode = #tpu.pipeline_mode<synchronous>, transform_indices = @transform_5, window_bounds = array<i64: 4, 32, 8>}, {pipeline_mode = #tpu.pipeline_mode<synchronous>, transform_indices = @transform_6, window_bounds = array<i64: 4, 1, 8>}, {pipeline_mode = #tpu.pipeline_mode<synchronous>, transform_indices = @transform_7, window_bounds = array<i64: 4, 32, 8>}, {pipeline_mode = #tpu.pipeline_mode<synchronous>, transform_indices = @transform_8, window_bounds = array<i64: 4, 1, 8>}, {transform_indices = @transform_9, window_bounds = array<i64: 4, 8, 8>}, {transform_indices = @transform_10, window_bounds = array<i64: 4, 8, 8>}, {transform_indices = @transform_11, window_bounds = array<i64: 4, 8, 8>}]} {
    %c0 = arith.constant 0 : index
    %c0_0 = arith.constant 0 : index
    %0 = vector.load %arg1[%c0, %c0_0] : memref<8x32xf32, #tpu.memory_space<vmem>>, vector<8x32xf32>
    %1 = arith.truncf %0 : vector<8x32xf32> to vector<8x32xbf16>
    %c0_1 = arith.constant 0 : index
    %c0_2 = arith.constant 0 : index
    %2 = vector.load %arg2[%c0_1, %c0_2] : memref<8x32xf32, #tpu.memory_space<vmem>>, vector<8x32xf32>
    %3 = arith.truncf %2 : vector<8x32xf32> to vector<8x32xbf16>
    %c0_3 = arith.constant 0 : index
    %c0_4 = arith.constant 0 : index
    %4 = vector.load %arg3[%c0_3, %c0_4] : memref<8x32xf32, #tpu.memory_space<vmem>>, vector<8x32xf32>
    %5 = arith.truncf %4 : vector<8x32xf32> to vector<8x32xbf16>
    %c0_5 = arith.constant 0 : index
    %c0_6 = arith.constant 0 : index
    %c0_7 = arith.constant 0 : index
    %6 = vector.load %arg4[%c0_5, %c0_6, %c0_7] : memref<4x32x8xbf16, #tpu.memory_space<vmem>>, vector<1x32x8xbf16>
    %7 = vector.shape_cast %6 : vector<1x32x8xbf16> to vector<32x8xbf16>
    %cst = arith.constant dense<0.000000e+00> : vector<8x8xf32>
    %8 = tpu.matmul %1, %7, %cst {dimension_numbers = #tpu.dot_dimension_numbers<[1], [0], [0], [1], [0, 0, 1, 1], [], []>} : vector<8x32xbf16>, vector<32x8xbf16>, vector<8x8xf32> -> vector<8x8xf32>
    %c0_8 = arith.constant 0 : index
    %c0_9 = arith.constant 0 : index
    %c0_10 = arith.constant 0 : index
    %9 = vector.load %arg5[%c0_8, %c0_9, %c0_10] : memref<4x1x8xbf16, #tpu.memory_space<vmem>>, vector<1x1x8xbf16>
    %10 = vector.shape_cast %9 : vector<1x1x8xbf16> to vector<1x8xbf16>
    %11 = arith.extf %10 : vector<1x8xbf16> to vector<1x8xf32>
    %12 = vector.broadcast %11 : vector<1x8xf32> to vector<8x8xf32>
    %13 = arith.addf %8, %12 : vector<8x8xf32>
    %14 = arith.truncf %13 : vector<8x8xf32> to vector<8x8xbf16>
    %c0_11 = arith.constant 0 : index
    %c0_12 = arith.constant 0 : index
    %c0_13 = arith.constant 0 : index
    %15 = vector.load %arg10[%c0_11, %c0_12, %c0_13] : memref<4x8x8xbf16, #tpu.memory_space<vmem>>, vector<1x8x8xbf16>
    %16 = vector.shape_cast %15 : vector<1x8x8xbf16> to vector<8x8xbf16>
    %17 = vector.shape_cast %14 : vector<8x8xbf16> to vector<1x8x8xbf16>
    tpu.vector_store %arg10[%c0_11, %c0_12, %c0_13], %17 {strides = array<i32>} : memref<4x8x8xbf16, #tpu.memory_space<vmem>>, vector<1x8x8xbf16>,
    %c1 = arith.constant 1 : index
    %c0_14 = arith.constant 0 : index
    %c0_15 = arith.constant 0 : index
    %18 = vector.load %arg4[%c1, %c0_14, %c0_15] : memref<4x32x8xbf16, #tpu.memory_space<vmem>>, vector<1x32x8xbf16>
    %19 = vector.shape_cast %18 : vector<1x32x8xbf16> to vector<32x8xbf16>
    %cst_16 = arith.constant dense<0.000000e+00> : vector<8x8xf32>
    %20 = tpu.matmul %1, %19, %cst_16 {dimension_numbers = #tpu.dot_dimension_numbers<[1], [0], [0], [1], [0, 0, 1, 1], [], []>} : vector<8x32xbf16>, vector<32x8xbf16>, vector<8x8xf32> -> vector<8x8xf32>
    %c1_17 = arith.constant 1 : index
    %c0_18 = arith.constant 0 : index
    %c0_19 = arith.constant 0 : index
    %21 = vector.load %arg5[%c1_17, %c0_18, %c0_19] : memref<4x1x8xbf16, #tpu.memory_space<vmem>>, vector<1x1x8xbf16>
    %22 = vector.shape_cast %21 : vector<1x1x8xbf16> to vector<1x8xbf16>
    %23 = arith.extf %22 : vector<1x8xbf16> to vector<1x8xf32>
    %24 = vector.broadcast %23 : vector<1x8xf32> to vector<8x8xf32>
    %25 = arith.addf %20, %24 : vector<8x8xf32>
    %26 = arith.truncf %25 : vector<8x8xf32> to vector<8x8xbf16>
    %c1_20 = arith.constant 1 : index
    %c0_21 = arith.constant 0 : index
    %c0_22 = arith.constant 0 : index
    %27 = vector.load %arg10[%c1_20, %c0_21, %c0_22] : memref<4x8x8xbf16, #tpu.memory_space<vmem>>, vector<1x8x8xbf16>
    %28 = vector.shape_cast %27 : vector<1x8x8xbf16> to vector<8x8xbf16>
    %29 = vector.shape_cast %26 : vector<8x8xbf16> to vector<1x8x8xbf16>
    tpu.vector_store %arg10[%c1_20, %c0_21, %c0_22], %29 {strides = array<i32>} : memref<4x8x8xbf16, #tpu.memory_space<vmem>>, vector<1x8x8xbf16>,
    %c2 = arith.constant 2 : index
    %c0_23 = arith.constant 0 : index
    %c0_24 = arith.constant 0 : index
    %30 = vector.load %arg4[%c2, %c0_23, %c0_24] : memref<4x32x8xbf16, #tpu.memory_space<vmem>>, vector<1x32x8xbf16>
    %31 = vector.shape_cast %30 : vector<1x32x8xbf16> to vector<32x8xbf16>
    %cst_25 = arith.constant dense<0.000000e+00> : vector<8x8xf32>
    %32 = tpu.matmul %1, %31, %cst_25 {dimension_numbers = #tpu.dot_dimension_numbers<[1], [0], [0], [1], [0, 0, 1, 1], [], []>} : vector<8x32xbf16>, vector<32x8xbf16>, vector<8x8xf32> -> vector<8x8xf32>
    %c2_26 = arith.constant 2 : index
    %c0_27 = arith.constant 0 : index
    %c0_28 = arith.constant 0 : index
    %33 = vector.load %arg5[%c2_26, %c0_27, %c0_28] : memref<4x1x8xbf16, #tpu.memory_space<vmem>>, vector<1x1x8xbf16>
    %34 = vector.shape_cast %33 : vector<1x1x8xbf16> to vector<1x8xbf16>
    %35 = arith.extf %34 : vector<1x8xbf16> to vector<1x8xf32>
    %36 = vector.broadcast %35 : vector<1x8xf32> to vector<8x8xf32>
    %37 = arith.addf %32, %36 : vector<8x8xf32>
    %38 = arith.truncf %37 : vector<8x8xf32> to vector<8x8xbf16>
    %c2_29 = arith.constant 2 : index
    %c0_30 = arith.constant 0 : index
    %c0_31 = arith.constant 0 : index
    %39 = vector.load %arg10[%c2_29, %c0_30, %c0_31] : memref<4x8x8xbf16, #tpu.memory_space<vmem>>, vector<1x8x8xbf16>
    %40 = vector.shape_cast %39 : vector<1x8x8xbf16> to vector<8x8xbf16>
    %41 = vector.shape_cast %38 : vector<8x8xbf16> to vector<1x8x8xbf16>
    tpu.vector_store %arg10[%c2_29, %c0_30, %c0_31], %41 {strides = array<i32>} : memref<4x8x8xbf16, #tpu.memory_space<vmem>>, vector<1x8x8xbf16>,
    %c3 = arith.constant 3 : index
    %c0_32 = arith.constant 0 : index
    %c0_33 = arith.constant 0 : index
    %42 = vector.load %arg4[%c3, %c0_32, %c0_33] : memref<4x32x8xbf16, #tpu.memory_space<vmem>>, vector<1x32x8xbf16>
    %43 = vector.shape_cast %42 : vector<1x32x8xbf16> to vector<32x8xbf16>
    %cst_34 = arith.constant dense<0.000000e+00> : vector<8x8xf32>
    %44 = tpu.matmul %1, %43, %cst_34 {dimension_numbers = #tpu.dot_dimension_numbers<[1], [0], [0], [1], [0, 0, 1, 1], [], []>} : vector<8x32xbf16>, vector<32x8xbf16>, vector<8x8xf32> -> vector<8x8xf32>
    %c3_35 = arith.constant 3 : index
    %c0_36 = arith.constant 0 : index
    %c0_37 = arith.constant 0 : index
    %45 = vector.load %arg5[%c3_35, %c0_36, %c0_37] : memref<4x1x8xbf16, #tpu.memory_space<vmem>>, vector<1x1x8xbf16>
    %46 = vector.shape_cast %45 : vector<1x1x8xbf16> to vector<1x8xbf16>
    %47 = arith.extf %46 : vector<1x8xbf16> to vector<1x8xf32>
    %48 = vector.broadcast %47 : vector<1x8xf32> to vector<8x8xf32>
    %49 = arith.addf %44, %48 : vector<8x8xf32>
    %50 = arith.truncf %49 : vector<8x8xf32> to vector<8x8xbf16>
    %c3_38 = arith.constant 3 : index
    %c0_39 = arith.constant 0 : index
    %c0_40 = arith.constant 0 : index
    %51 = vector.load %arg10[%c3_38, %c0_39, %c0_40] : memref<4x8x8xbf16, #tpu.memory_space<vmem>>, vector<1x8x8xbf16>
    %52 = vector.shape_cast %51 : vector<1x8x8xbf16> to vector<8x8xbf16>
    %53 = vector.shape_cast %50 : vector<8x8xbf16> to vector<1x8x8xbf16>
    tpu.vector_store %arg10[%c3_38, %c0_39, %c0_40], %53 {strides = array<i32>} : memref<4x8x8xbf16, #tpu.memory_space<vmem>>, vector<1x8x8xbf16>,
    %c0_41 = arith.constant 0 : index
    %c0_42 = arith.constant 0 : index
    %c0_43 = arith.constant 0 : index
    %54 = vector.load %arg6[%c0_41, %c0_42, %c0_43] : memref<4x32x8xbf16, #tpu.memory_space<vmem>>, vector<1x32x8xbf16>
    %55 = vector.shape_cast %54 : vector<1x32x8xbf16> to vector<32x8xbf16>
    %cst_44 = arith.constant dense<0.000000e+00> : vector<8x8xf32>
    %56 = tpu.matmul %3, %55, %cst_44 {dimension_numbers = #tpu.dot_dimension_numbers<[1], [0], [0], [1], [0, 0, 1, 1], [], []>} : vector<8x32xbf16>, vector<32x8xbf16>, vector<8x8xf32> -> vector<8x8xf32>
    %c0_45 = arith.constant 0 : index
    %c0_46 = arith.constant 0 : index
    %c0_47 = arith.constant 0 : index
    %57 = vector.load %arg7[%c0_45, %c0_46, %c0_47] : memref<4x1x8xbf16, #tpu.memory_space<vmem>>, vector<1x1x8xbf16>
    %58 = vector.shape_cast %57 : vector<1x1x8xbf16> to vector<1x8xbf16>
    %59 = arith.extf %58 : vector<1x8xbf16> to vector<1x8xf32>
    %60 = vector.broadcast %59 : vector<1x8xf32> to vector<8x8xf32>
    %61 = arith.addf %56, %60 : vector<8x8xf32>
    %62 = arith.truncf %61 : vector<8x8xf32> to vector<8x8xbf16>
    %c0_48 = arith.constant 0 : index
    %c0_49 = arith.constant 0 : index
    %c0_50 = arith.constant 0 : index
    %63 = vector.load %arg11[%c0_48, %c0_49, %c0_50] : memref<4x8x8xbf16, #tpu.memory_space<vmem>>, vector<1x8x8xbf16>
    %64 = vector.shape_cast %63 : vector<1x8x8xbf16> to vector<8x8xbf16>
    %65 = vector.shape_cast %62 : vector<8x8xbf16> to vector<1x8x8xbf16>
    tpu.vector_store %arg11[%c0_48, %c0_49, %c0_50], %65 {strides = array<i32>} : memref<4x8x8xbf16, #tpu.memory_space<vmem>>, vector<1x8x8xbf16>,
    %c1_51 = arith.constant 1 : index
    %c0_52 = arith.constant 0 : index
    %c0_53 = arith.constant 0 : index
    %66 = vector.load %arg6[%c1_51, %c0_52, %c0_53] : memref<4x32x8xbf16, #tpu.memory_space<vmem>>, vector<1x32x8xbf16>
    %67 = vector.shape_cast %66 : vector<1x32x8xbf16> to vector<32x8xbf16>
    %cst_54 = arith.constant dense<0.000000e+00> : vector<8x8xf32>
    %68 = tpu.matmul %3, %67, %cst_54 {dimension_numbers = #tpu.dot_dimension_numbers<[1], [0], [0], [1], [0, 0, 1, 1], [], []>} : vector<8x32xbf16>, vector<32x8xbf16>, vector<8x8xf32> -> vector<8x8xf32>
    %c1_55 = arith.constant 1 : index
    %c0_56 = arith.constant 0 : index
    %c0_57 = arith.constant 0 : index
    %69 = vector.load %arg7[%c1_55, %c0_56, %c0_57] : memref<4x1x8xbf16, #tpu.memory_space<vmem>>, vector<1x1x8xbf16>
    %70 = vector.shape_cast %69 : vector<1x1x8xbf16> to vector<1x8xbf16>
    %71 = arith.extf %70 : vector<1x8xbf16> to vector<1x8xf32>
    %72 = vector.broadcast %71 : vector<1x8xf32> to vector<8x8xf32>
    %73 = arith.addf %68, %72 : vector<8x8xf32>
    %74 = arith.truncf %73 : vector<8x8xf32> to vector<8x8xbf16>
    %c1_58 = arith.constant 1 : index
    %c0_59 = arith.constant 0 : index
    %c0_60 = arith.constant 0 : index
    %75 = vector.load %arg11[%c1_58, %c0_59, %c0_60] : memref<4x8x8xbf16, #tpu.memory_space<vmem>>, vector<1x8x8xbf16>
    %76 = vector.shape_cast %75 : vector<1x8x8xbf16> to vector<8x8xbf16>
    %77 = vector.shape_cast %74 : vector<8x8xbf16> to vector<1x8x8xbf16>
    tpu.vector_store %arg11[%c1_58, %c0_59, %c0_60], %77 {strides = array<i32>} : memref<4x8x8xbf16, #tpu.memory_space<vmem>>, vector<1x8x8xbf16>,
    %c2_61 = arith.constant 2 : index
    %c0_62 = arith.constant 0 : index
    %c0_63 = arith.constant 0 : index
    %78 = vector.load %arg6[%c2_61, %c0_62, %c0_63] : memref<4x32x8xbf16, #tpu.memory_space<vmem>>, vector<1x32x8xbf16>
    %79 = vector.shape_cast %78 : vector<1x32x8xbf16> to vector<32x8xbf16>
    %cst_64 = arith.constant dense<0.000000e+00> : vector<8x8xf32>
    %80 = tpu.matmul %3, %79, %cst_64 {dimension_numbers = #tpu.dot_dimension_numbers<[1], [0], [0], [1], [0, 0, 1, 1], [], []>} : vector<8x32xbf16>, vector<32x8xbf16>, vector<8x8xf32> -> vector<8x8xf32>
    %c2_65 = arith.constant 2 : index
    %c0_66 = arith.constant 0 : index
    %c0_67 = arith.constant 0 : index
    %81 = vector.load %arg7[%c2_65, %c0_66, %c0_67] : memref<4x1x8xbf16, #tpu.memory_space<vmem>>, vector<1x1x8xbf16>
    %82 = vector.shape_cast %81 : vector<1x1x8xbf16> to vector<1x8xbf16>
    %83 = arith.extf %82 : vector<1x8xbf16> to vector<1x8xf32>
    %84 = vector.broadcast %83 : vector<1x8xf32> to vector<8x8xf32>
    %85 = arith.addf %80, %84 : vector<8x8xf32>
    %86 = arith.truncf %85 : vector<8x8xf32> to vector<8x8xbf16>
    %c2_68 = arith.constant 2 : index
    %c0_69 = arith.constant 0 : index
    %c0_70 = arith.constant 0 : index
    %87 = vector.load %arg11[%c2_68, %c0_69, %c0_70] : memref<4x8x8xbf16, #tpu.memory_space<vmem>>, vector<1x8x8xbf16>
    %88 = vector.shape_cast %87 : vector<1x8x8xbf16> to vector<8x8xbf16>
    %89 = vector.shape_cast %86 : vector<8x8xbf16> to vector<1x8x8xbf16>
    tpu.vector_store %arg11[%c2_68, %c0_69, %c0_70], %89 {strides = array<i32>} : memref<4x8x8xbf16, #tpu.memory_space<vmem>>, vector<1x8x8xbf16>,
    %c3_71 = arith.constant 3 : index
    %c0_72 = arith.constant 0 : index
    %c0_73 = arith.constant 0 : index
    %90 = vector.load %arg6[%c3_71, %c0_72, %c0_73] : memref<4x32x8xbf16, #tpu.memory_space<vmem>>, vector<1x32x8xbf16>
    %91 = vector.shape_cast %90 : vector<1x32x8xbf16> to vector<32x8xbf16>
    %cst_74 = arith.constant dense<0.000000e+00> : vector<8x8xf32>
    %92 = tpu.matmul %3, %91, %cst_74 {dimension_numbers = #tpu.dot_dimension_numbers<[1], [0], [0], [1], [0, 0, 1, 1], [], []>} : vector<8x32xbf16>, vector<32x8xbf16>, vector<8x8xf32> -> vector<8x8xf32>
    %c3_75 = arith.constant 3 : index
    %c0_76 = arith.constant 0 : index
    %c0_77 = arith.constant 0 : index
    %93 = vector.load %arg7[%c3_75, %c0_76, %c0_77] : memref<4x1x8xbf16, #tpu.memory_space<vmem>>, vector<1x1x8xbf16>
    %94 = vector.shape_cast %93 : vector<1x1x8xbf16> to vector<1x8xbf16>
    %95 = arith.extf %94 : vector<1x8xbf16> to vector<1x8xf32>
    %96 = vector.broadcast %95 : vector<1x8xf32> to vector<8x8xf32>
    %97 = arith.addf %92, %96 : vector<8x8xf32>
    %98 = arith.truncf %97 : vector<8x8xf32> to vector<8x8xbf16>
    %c3_78 = arith.constant 3 : index
    %c0_79 = arith.constant 0 : index
    %c0_80 = arith.constant 0 : index
    %99 = vector.load %arg11[%c3_78, %c0_79, %c0_80] : memref<4x8x8xbf16, #tpu.memory_space<vmem>>, vector<1x8x8xbf16>
    %100 = vector.shape_cast %99 : vector<1x8x8xbf16> to vector<8x8xbf16>
    %101 = vector.shape_cast %98 : vector<8x8xbf16> to vector<1x8x8xbf16>
    tpu.vector_store %arg11[%c3_78, %c0_79, %c0_80], %101 {strides = array<i32>} : memref<4x8x8xbf16, #tpu.memory_space<vmem>>, vector<1x8x8xbf16>,
    %c0_81 = arith.constant 0 : index
    %c0_82 = arith.constant 0 : index
    %c0_83 = arith.constant 0 : index
    %102 = vector.load %arg8[%c0_81, %c0_82, %c0_83] : memref<4x32x8xbf16, #tpu.memory_space<vmem>>, vector<1x32x8xbf16>
    %103 = vector.shape_cast %102 : vector<1x32x8xbf16> to vector<32x8xbf16>
    %cst_84 = arith.constant dense<0.000000e+00> : vector<8x8xf32>
    %104 = tpu.matmul %5, %103, %cst_84 {dimension_numbers = #tpu.dot_dimension_numbers<[1], [0], [0], [1], [0, 0, 1, 1], [], []>} : vector<8x32xbf16>, vector<32x8xbf16>, vector<8x8xf32> -> vector<8x8xf32>
    %c0_85 = arith.constant 0 : index
    %c0_86 = arith.constant 0 : index
    %c0_87 = arith.constant 0 : index
    %105 = vector.load %arg9[%c0_85, %c0_86, %c0_87] : memref<4x1x8xbf16, #tpu.memory_space<vmem>>, vector<1x1x8xbf16>
    %106 = vector.shape_cast %105 : vector<1x1x8xbf16> to vector<1x8xbf16>
    %107 = arith.extf %106 : vector<1x8xbf16> to vector<1x8xf32>
    %108 = vector.broadcast %107 : vector<1x8xf32> to vector<8x8xf32>
    %109 = arith.addf %104, %108 : vector<8x8xf32>
    %110 = arith.truncf %109 : vector<8x8xf32> to vector<8x8xbf16>
    %c0_88 = arith.constant 0 : index
    %c0_89 = arith.constant 0 : index
    %c0_90 = arith.constant 0 : index
    %111 = vector.load %arg12[%c0_88, %c0_89, %c0_90] : memref<4x8x8xbf16, #tpu.memory_space<vmem>>, vector<1x8x8xbf16>
    %112 = vector.shape_cast %111 : vector<1x8x8xbf16> to vector<8x8xbf16>
    %113 = vector.shape_cast %110 : vector<8x8xbf16> to vector<1x8x8xbf16>
    tpu.vector_store %arg12[%c0_88, %c0_89, %c0_90], %113 {strides = array<i32>} : memref<4x8x8xbf16, #tpu.memory_space<vmem>>, vector<1x8x8xbf16>,
    %c1_91 = arith.constant 1 : index
    %c0_92 = arith.constant 0 : index
    %c0_93 = arith.constant 0 : index
    %114 = vector.load %arg8[%c1_91, %c0_92, %c0_93] : memref<4x32x8xbf16, #tpu.memory_space<vmem>>, vector<1x32x8xbf16>
    %115 = vector.shape_cast %114 : vector<1x32x8xbf16> to vector<32x8xbf16>
    %cst_94 = arith.constant dense<0.000000e+00> : vector<8x8xf32>
    %116 = tpu.matmul %5, %115, %cst_94 {dimension_numbers = #tpu.dot_dimension_numbers<[1], [0], [0], [1], [0, 0, 1, 1], [], []>} : vector<8x32xbf16>, vector<32x8xbf16>, vector<8x8xf32> -> vector<8x8xf32>
    %c1_95 = arith.constant 1 : index
    %c0_96 = arith.constant 0 : index
    %c0_97 = arith.constant 0 : index
    %117 = vector.load %arg9[%c1_95, %c0_96, %c0_97] : memref<4x1x8xbf16, #tpu.memory_space<vmem>>, vector<1x1x8xbf16>
    %118 = vector.shape_cast %117 : vector<1x1x8xbf16> to vector<1x8xbf16>
    %119 = arith.extf %118 : vector<1x8xbf16> to vector<1x8xf32>
    %120 = vector.broadcast %119 : vector<1x8xf32> to vector<8x8xf32>
    %121 = arith.addf %116, %120 : vector<8x8xf32>
    %122 = arith.truncf %121 : vector<8x8xf32> to vector<8x8xbf16>
    %c1_98 = arith.constant 1 : index
    %c0_99 = arith.constant 0 : index
    %c0_100 = arith.constant 0 : index
    %123 = vector.load %arg12[%c1_98, %c0_99, %c0_100] : memref<4x8x8xbf16, #tpu.memory_space<vmem>>, vector<1x8x8xbf16>
    %124 = vector.shape_cast %123 : vector<1x8x8xbf16> to vector<8x8xbf16>
    %125 = vector.shape_cast %122 : vector<8x8xbf16> to vector<1x8x8xbf16>
    tpu.vector_store %arg12[%c1_98, %c0_99, %c0_100], %125 {strides = array<i32>} : memref<4x8x8xbf16, #tpu.memory_space<vmem>>, vector<1x8x8xbf16>,
    %c2_101 = arith.constant 2 : index
    %c0_102 = arith.constant 0 : index
    %c0_103 = arith.constant 0 : index
    %126 = vector.load %arg8[%c2_101, %c0_102, %c0_103] : memref<4x32x8xbf16, #tpu.memory_space<vmem>>, vector<1x32x8xbf16>
    %127 = vector.shape_cast %126 : vector<1x32x8xbf16> to vector<32x8xbf16>
    %cst_104 = arith.constant dense<0.000000e+00> : vector<8x8xf32>
    %128 = tpu.matmul %5, %127, %cst_104 {dimension_numbers = #tpu.dot_dimension_numbers<[1], [0], [0], [1], [0, 0, 1, 1], [], []>} : vector<8x32xbf16>, vector<32x8xbf16>, vector<8x8xf32> -> vector<8x8xf32>
    %c2_105 = arith.constant 2 : index
    %c0_106 = arith.constant 0 : index
    %c0_107 = arith.constant 0 : index
    %129 = vector.load %arg9[%c2_105, %c0_106, %c0_107] : memref<4x1x8xbf16, #tpu.memory_space<vmem>>, vector<1x1x8xbf16>
    %130 = vector.shape_cast %129 : vector<1x1x8xbf16> to vector<1x8xbf16>
    %131 = arith.extf %130 : vector<1x8xbf16> to vector<1x8xf32>
    %132 = vector.broadcast %131 : vector<1x8xf32> to vector<8x8xf32>
    %133 = arith.addf %128, %132 : vector<8x8xf32>
    %134 = arith.truncf %133 : vector<8x8xf32> to vector<8x8xbf16>
    %c2_108 = arith.constant 2 : index
    %c0_109 = arith.constant 0 : index
    %c0_110 = arith.constant 0 : index
    %135 = vector.load %arg12[%c2_108, %c0_109, %c0_110] : memref<4x8x8xbf16, #tpu.memory_space<vmem>>, vector<1x8x8xbf16>
    %136 = vector.shape_cast %135 : vector<1x8x8xbf16> to vector<8x8xbf16>
    %137 = vector.shape_cast %134 : vector<8x8xbf16> to vector<1x8x8xbf16>
    tpu.vector_store %arg12[%c2_108, %c0_109, %c0_110], %137 {strides = array<i32>} : memref<4x8x8xbf16, #tpu.memory_space<vmem>>, vector<1x8x8xbf16>,
    %c3_111 = arith.constant 3 : index
    %c0_112 = arith.constant 0 : index
    %c0_113 = arith.constant 0 : index
    %138 = vector.load %arg8[%c3_111, %c0_112, %c0_113] : memref<4x32x8xbf16, #tpu.memory_space<vmem>>, vector<1x32x8xbf16>
    %139 = vector.shape_cast %138 : vector<1x32x8xbf16> to vector<32x8xbf16>
    %cst_114 = arith.constant dense<0.000000e+00> : vector<8x8xf32>
    %140 = tpu.matmul %5, %139, %cst_114 {dimension_numbers = #tpu.dot_dimension_numbers<[1], [0], [0], [1], [0, 0, 1, 1], [], []>} : vector<8x32xbf16>, vector<32x8xbf16>, vector<8x8xf32> -> vector<8x8xf32>
    %c3_115 = arith.constant 3 : index
    %c0_116 = arith.constant 0 : index
    %c0_117 = arith.constant 0 : index
    %141 = vector.load %arg9[%c3_115, %c0_116, %c0_117] : memref<4x1x8xbf16, #tpu.memory_space<vmem>>, vector<1x1x8xbf16>
    %142 = vector.shape_cast %141 : vector<1x1x8xbf16> to vector<1x8xbf16>
    %143 = arith.extf %142 : vector<1x8xbf16> to vector<1x8xf32>
    %144 = vector.broadcast %143 : vector<1x8xf32> to vector<8x8xf32>
    %145 = arith.addf %140, %144 : vector<8x8xf32>
    %146 = arith.truncf %145 : vector<8x8xf32> to vector<8x8xbf16>
    %c3_118 = arith.constant 3 : index
    %c0_119 = arith.constant 0 : index
    %c0_120 = arith.constant 0 : index
    %147 = vector.load %arg12[%c3_118, %c0_119, %c0_120] : memref<4x8x8xbf16, #tpu.memory_space<vmem>>, vector<1x8x8xbf16>
    %148 = vector.shape_cast %147 : vector<1x8x8xbf16> to vector<8x8xbf16>
    %149 = vector.shape_cast %146 : vector<8x8xbf16> to vector<1x8x8xbf16>
    tpu.vector_store %arg12[%c3_118, %c0_119, %c0_120], %149 {strides = array<i32>} : memref<4x8x8xbf16, #tpu.memory_space<vmem>>, vector<1x8x8xbf16>,
    return
  }
  func.func @transform_0(%arg0: i32) -> (i32, i32) {
    %c0_i32 = arith.constant 0 : i32
    %c0_i32_0 = arith.constant 0 : i32
    return %arg0, %c0_i32 : i32, i32
  }
  func.func @transform_1(%arg0: i32) -> (i32, i32) {
    %c0_i32 = arith.constant 0 : i32
    %c0_i32_0 = arith.constant 0 : i32
    return %arg0, %c0_i32 : i32, i32
  }
  func.func @transform_2(%arg0: i32) -> (i32, i32) {
    %c0_i32 = arith.constant 0 : i32
    %c0_i32_0 = arith.constant 0 : i32
    return %arg0, %c0_i32 : i32, i32
  }
  func.func @transform_3(%arg0: i32) -> (i32, i32, i32) {
    %c0_i32 = arith.constant 0 : i32
    %c0_i32_0 = arith.constant 0 : i32
    %c0_i32_1 = arith.constant 0 : i32
    %c0_i32_2 = arith.constant 0 : i32
    return %c0_i32, %c0_i32_0, %c0_i32_1 : i32, i32, i32
  }
  func.func @transform_4(%arg0: i32) -> (i32, i32, i32) {
    %c0_i32 = arith.constant 0 : i32
    %c0_i32_0 = arith.constant 0 : i32
    %c0_i32_1 = arith.constant 0 : i32
    %c0_i32_2 = arith.constant 0 : i32
    return %c0_i32, %c0_i32_0, %c0_i32_1 : i32, i32, i32
  }
  func.func @transform_5(%arg0: i32) -> (i32, i32, i32) {
    %c0_i32 = arith.constant 0 : i32
    %c0_i32_0 = arith.constant 0 : i32
    %c0_i32_1 = arith.constant 0 : i32
    %c0_i32_2 = arith.constant 0 : i32
    return %c0_i32, %c0_i32_0, %c0_i32_1 : i32, i32, i32
  }
  func.func @transform_6(%arg0: i32) -> (i32, i32, i32) {
    %c0_i32 = arith.constant 0 : i32
    %c0_i32_0 = arith.constant 0 : i32
    %c0_i32_1 = arith.constant 0 : i32
    %c0_i32_2 = arith.constant 0 : i32
    return %c0_i32, %c0_i32_0, %c0_i32_1 : i32, i32, i32
  }
  func.func @transform_7(%arg0: i32) -> (i32, i32, i32) {
    %c0_i32 = arith.constant 0 : i32
    %c0_i32_0 = arith.constant 0 : i32
    %c0_i32_1 = arith.constant 0 : i32
    %c0_i32_2 = arith.constant 0 : i32
    return %c0_i32, %c0_i32_0, %c0_i32_1 : i32, i32, i32
  }
  func.func @transform_8(%arg0: i32) -> (i32, i32, i32) {
    %c0_i32 = arith.constant 0 : i32
    %c0_i32_0 = arith.constant 0 : i32
    %c0_i32_1 = arith.constant 0 : i32
    %c0_i32_2 = arith.constant 0 : i32
    return %c0_i32, %c0_i32_0, %c0_i32_1 : i32, i32, i32
  }
  func.func @transform_9(%arg0: i32) -> (i32, i32, i32) {
    %c0_i32 = arith.constant 0 : i32
    %c0_i32_0 = arith.constant 0 : i32
    %c0_i32_1 = arith.constant 0 : i32
    return %c0_i32, %arg0, %c0_i32_0 : i32, i32, i32
  }
  func.func @transform_10(%arg0: i32) -> (i32, i32, i32) {
    %c0_i32 = arith.constant 0 : i32
    %c0_i32_0 = arith.constant 0 : i32
    %c0_i32_1 = arith.constant 0 : i32
    return %c0_i32, %arg0, %c0_i32_0 : i32, i32, i32
  }
  func.func @transform_11(%arg0: i32) -> (i32, i32, i32) {
    %c0_i32 = arith.constant 0 : i32
    %c0_i32_0 = arith.constant 0 : i32
    %c0_i32_1 = arith.constant 0 : i32
    return %c0_i32, %arg0, %c0_i32_0 : i32, i32, i32
  }
}

</mosaic_0001>

<llo_original>
// kernel: tpu_custom_call.1
$region0: #{tpu_custom_call.1}
  #allocation0 [shape = 'u32[]', space=smem, size = 0x4, offset = 0x4, fixed_abs, tag = 'smem constant byte address 0x4 - core index']
  #allocation1 [shape = 'u32[144,128]{1,0:T(1,128)}', space=vmem, size = 0x12000, scoped, tag = 'internal scratch']
  %s0 = inlined_call_operand.vmem [shape: f32[16,32], index: 0, kind: input, shape index: {}]
  %s1 = inlined_call_operand.vmem [shape: f32[16,32], index: 1, kind: input, shape index: {}]
  %s2 = inlined_call_operand.vmem [shape: f32[16,32], index: 2, kind: input, shape index: {}]
  %s3 = inlined_call_operand.vmem [shape: bf16[4,32,8], index: 3, kind: input, shape index: {}]
  %s4 = inlined_call_operand.vmem [shape: bf16[4,1,8], index: 4, kind: input, shape index: {}]
  %s5 = inlined_call_operand.vmem [shape: bf16[4,32,8], index: 5, kind: input, shape index: {}]
  %s6 = inlined_call_operand.vmem [shape: bf16[4,1,8], index: 6, kind: input, shape index: {}]
  %s7 = inlined_call_operand.vmem [shape: bf16[4,32,8], index: 7, kind: input, shape index: {}]
  %s8 = inlined_call_operand.vmem [shape: bf16[4,1,8], index: 8, kind: input, shape index: {}]
  %s9 = inlined_call_operand.vmem [shape: bf16[4,16,8], index: 9, kind: output, shape index: {0}]
  %s10 = inlined_call_operand.vmem [shape: bf16[4,16,8], index: 10, kind: output, shape index: {1}]
  %s11 = inlined_call_operand.vmem [shape: bf16[4,16,8], index: 11, kind: output, shape index: {2}]
  %12 = xla_tuple %s9, %s10, %s11
  %s13 = sld [smem:[#allocation0]]
  $region196: #{tpu_custom_call.1} parent=0
    _
  %s15 = ssub.s32 1, %s13
  %s16 = scalar_select 0, %s15, %s13
  $region1: #{tpu_custom_call.1} parent=0
    #allocation2 [shape = 'u8[16384]{0}', space=vmem, size = 0x4000, scoped, tag = 'output window, operand 0']
    #allocation3 [shape = 'u8[16384]{0}', space=vmem, size = 0x4000, scoped, tag = 'output window, operand 1']
    #allocation4 [shape = 'u8[16384]{0}', space=vmem, size = 0x4000, scoped, tag = 'output window, operand 2']
    loop: start=0, step=1, limit=4
    $region2: #{tpu_custom_call.1} parent=1 // loop_pre_header
      _
    $region3: #{tpu_custom_call.1} parent=1 // loop_header
      %s18 = sphi 0, %s22
      %p19 = scmp.ge.s32.totalorder %s18, 4
      %s28 = sphi 0, %s30
      %s31 = sphi 0, %s28
      %s32 = sphi 0, %s31
      %s48 = sphi 0, %s32
      %s54 = sphi 0, %s56
      %s57 = sphi 0, %s54
      %s58 = sphi 0, %s57
      %s74 = sphi 0, %s58
      %s80 = sphi 0, %s82
      %s83 = sphi 0, %s80
      %s84 = sphi 0, %s83
      %s100 = sphi 0, %s84
      %s104 = sphi 0, %s104
      %s106 = sphi 0, %s104
      %s107 = sphi 0, %s106
      %s121 = sphi 0, %s107
      %s125 = sphi 0, %s125
      %s127 = sphi 0, %s125
      %s128 = sphi 0, %s127
      %s142 = sphi 0, %s128
      %s146 = sphi 0, %s146
      %s148 = sphi 0, %s146
      %s149 = sphi 0, %s148
      %s163 = sphi 0, %s149
      %s167 = sphi 0, %s167
      %s169 = sphi 0, %s167
      %s170 = sphi 0, %s169
      %s184 = sphi 0, %s170
      %s188 = sphi 0, %s188
      %s190 = sphi 0, %s188
      %s191 = sphi 0, %s190
      %s205 = sphi 0, %s191
      %s209 = sphi 0, %s209
      %s211 = sphi 0, %s209
      %s212 = sphi 0, %s211
      %s226 = sphi 0, %s212
      %s232 = sphi 0, %s234
      %s235 = sphi 0, %s232
      %s236 = sphi 0, %s235
      %s252 = sphi 0, %s236
      %s258 = sphi 0, %s260
      %s261 = sphi 0, %s258
      %s262 = sphi 0, %s261
      %s278 = sphi 0, %s262
      %s284 = sphi 0, %s286
      %s287 = sphi 0, %s284
      %s288 = sphi 0, %s287
      %s304 = sphi 0, %s288
    $region4: #{tpu_custom_call.1} parent=1 // loop_header_branch
      %21 = sbr.rel (%p19) target = $region8
    $region5: #{tpu_custom_call.1} parent=1 // loop_body
      %s23 = ssub.s32 %s18, 1
      %s24 = ssub.s32 %s18, 2
      %s25 = sadd.s32 %s18, 1
      %s26 = ssub.s32 %s18, %s25
      %p27 = scmp.eq.s32.totalorder %s26, 0
      %s29 = sadd.s32 %s28, 1
      %s30 = scalar_select %p27, %s28, %s29
      %p33 = pneg %p27
      %p34 = scmp.eq.s32.totalorder %s18, 1
      %p35 = por %p33, %p34
      %p36 = scmp.ne.s32.totalorder %s28, %s31
      %p37 = scmp.eq.s32.totalorder %s18, 0
      %p38 = por %p36, %p37
      %p39 = scmp.ne.s32.totalorder %s28, %s31
      %p40 = scmp.eq.s32.totalorder %s23, 1
      %p41 = por %p39, %p40
      %p42 = scmp.ne.s32.totalorder %s31, %s32
      %p43 = scmp.eq.s32.totalorder %s23, 0
      %p44 = por %p42, %p43
      %p45 = scmp.ne.s32.totalorder %s31, %s32
      %p46 = scmp.eq.s32.totalorder %s24, 1
      %p47 = por %p45, %p46
      %p49 = scmp.ne.s32.totalorder %s32, %s48
      %p50 = scmp.eq.s32.totalorder %s24, 0
      %p51 = por %p49, %p50
      %s52 = ssub.s32 %s18, %s25
      %p53 = scmp.eq.s32.totalorder %s52, 0
      %s55 = sadd.s32 %s54, 1
      %s56 = scalar_select %p53, %s54, %s55
      %p59 = pneg %p53
      %p60 = scmp.eq.s32.totalorder %s18, 1
      %p61 = por %p59, %p60
      %p62 = scmp.ne.s32.totalorder %s54, %s57
      %p63 = scmp.eq.s32.totalorder %s18, 0
      %p64 = por %p62, %p63
      %p65 = scmp.ne.s32.totalorder %s54, %s57
      %p66 = scmp.eq.s32.totalorder %s23, 1
      %p67 = por %p65, %p66
      %p68 = scmp.ne.s32.totalorder %s57, %s58
      %p69 = scmp.eq.s32.totalorder %s23, 0
      %p70 = por %p68, %p69
      %p71 = scmp.ne.s32.totalorder %s57, %s58
      %p72 = scmp.eq.s32.totalorder %s24, 1
      %p73 = por %p71, %p72
      %p75 = scmp.ne.s32.totalorder %s58, %s74
      %p76 = scmp.eq.s32.totalorder %s24, 0
      %p77 = por %p75, %p76
      %s78 = ssub.s32 %s18, %s25
      %p79 = scmp.eq.s32.totalorder %s78, 0
      %s81 = sadd.s32 %s80, 1
      %s82 = scalar_select %p79, %s80, %s81
      %p85 = pneg %p79
      %p86 = scmp.eq.s32.totalorder %s18, 1
      %p87 = por %p85, %p86
      %p88 = scmp.ne.s32.totalorder %s80, %s83
      %p89 = scmp.eq.s32.totalorder %s18, 0
      %p90 = por %p88, %p89
      %p91 = scmp.ne.s32.totalorder %s80, %s83
      %p92 = scmp.eq.s32.totalorder %s23, 1
      %p93 = por %p91, %p92
      %p94 = scmp.ne.s32.totalorder %s83, %s84
      %p95 = scmp.eq.s32.totalorder %s23, 0
      %p96 = por %p94, %p95
      %p97 = scmp.ne.s32.totalorder %s83, %s84
      %p98 = scmp.eq.s32.totalorder %s24, 1
      %p99 = por %p97, %p98
      %p101 = scmp.ne.s32.totalorder %s84, %s100
      %p102 = scmp.eq.s32.totalorder %s24, 0
      %p103 = por %p101, %p102
      %s105 = sadd.s32 %s104, 1
      %p108 = scmp.eq.s32.totalorder %s18, 1
      %p109 = scmp.ne.s32.totalorder %s104, %s106
      %p110 = scmp.eq.s32.totalorder %s18, 0
      %p111 = por %p109, %p110
      %p112 = scmp.ne.s32.totalorder %s104, %s106
      %p113 = scmp.eq.s32.totalorder %s23, 1
      %p114 = por %p112, %p113
      %p115 = scmp.ne.s32.totalorder %s106, %s107
      %p116 = scmp.eq.s32.totalorder %s23, 0
      %p117 = por %p115, %p116
      %p118 = scmp.ne.s32.totalorder %s106, %s107
      %p119 = scmp.eq.s32.totalorder %s24, 1
      %p120 = por %p118, %p119
      %p122 = scmp.ne.s32.totalorder %s107, %s121
      %p123 = scmp.eq.s32.totalorder %s24, 0
      %p124 = por %p122, %p123
      %s126 = sadd.s32 %s125, 1
      %p129 = scmp.eq.s32.totalorder %s18, 1
      %p130 = scmp.ne.s32.totalorder %s125, %s127
      %p131 = scmp.eq.s32.totalorder %s18, 0
      %p132 = por %p130, %p131
      %p133 = scmp.ne.s32.totalorder %s125, %s127
      %p134 = scmp.eq.s32.totalorder %s23, 1
      %p135 = por %p133, %p134
      %p136 = scmp.ne.s32.totalorder %s127, %s128
      %p137 = scmp.eq.s32.totalorder %s23, 0
      %p138 = por %p136, %p137
      %p139 = scmp.ne.s32.totalorder %s127, %s128
      %p140 = scmp.eq.s32.totalorder %s24, 1
      %p141 = por %p139, %p140
      %p143 = scmp.ne.s32.totalorder %s128, %s142
      %p144 = scmp.eq.s32.totalorder %s24, 0
      %p145 = por %p143, %p144
      %s147 = sadd.s32 %s146, 1
      %p150 = scmp.eq.s32.totalorder %s18, 1
      %p151 = scmp.ne.s32.totalorder %s146, %s148
      %p152 = scmp.eq.s32.totalorder %s18, 0
      %p153 = por %p151, %p152
      %p154 = scmp.ne.s32.totalorder %s146, %s148
      %p155 = scmp.eq.s32.totalorder %s23, 1
      %p156 = por %p154, %p155
      %p157 = scmp.ne.s32.totalorder %s148, %s149
      %p158 = scmp.eq.s32.totalorder %s23, 0
      %p159 = por %p157, %p158
      %p160 = scmp.ne.s32.totalorder %s148, %s149
      %p161 = scmp.eq.s32.totalorder %s24, 1
      %p162 = por %p160, %p161
      %p164 = scmp.ne.s32.totalorder %s149, %s163
      %p165 = scmp.eq.s32.totalorder %s24, 0
      %p166 = por %p164, %p165
      %s168 = sadd.s32 %s167, 1
      %p171 = scmp.eq.s32.totalorder %s18, 1
      %p172 = scmp.ne.s32.totalorder %s167, %s169
      %p173 = scmp.eq.s32.totalorder %s18, 0
      %p174 = por %p172, %p173
      %p175 = scmp.ne.s32.totalorder %s167, %s169
      %p176 = scmp.eq.s32.totalorder %s23, 1
      %p177 = por %p175, %p176
      %p178 = scmp.ne.s32.totalorder %s169, %s170
      %p179 = scmp.eq.s32.totalorder %s23, 0
      %p180 = por %p178, %p179
      %p181 = scmp.ne.s32.totalorder %s169, %s170
      %p182 = scmp.eq.s32.totalorder %s24, 1
      %p183 = por %p181, %p182
      %p185 = scmp.ne.s32.totalorder %s170, %s184
      %p186 = scmp.eq.s32.totalorder %s24, 0
      %p187 = por %p185, %p186
      %s189 = sadd.s32 %s188, 1
      %p192 = scmp.eq.s32.totalorder %s18, 1
      %p193 = scmp.ne.s32.totalorder %s188, %s190
      %p194 = scmp.eq.s32.totalorder %s18, 0
      %p195 = por %p193, %p194
      %p196 = scmp.ne.s32.totalorder %s188, %s190
      %p197 = scmp.eq.s32.totalorder %s23, 1
      %p198 = por %p196, %p197
      %p199 = scmp.ne.s32.totalorder %s190, %s191
      %p200 = scmp.eq.s32.totalorder %s23, 0
      %p201 = por %p199, %p200
      %p202 = scmp.ne.s32.totalorder %s190, %s191
      %p203 = scmp.eq.s32.totalorder %s24, 1
      %p204 = por %p202, %p203
      %p206 = scmp.ne.s32.totalorder %s191, %s205
      %p207 = scmp.eq.s32.totalorder %s24, 0
      %p208 = por %p206, %p207
      %s210 = sadd.s32 %s209, 1
      %p213 = scmp.eq.s32.totalorder %s18, 1
      %p214 = scmp.ne.s32.totalorder %s209, %s211
      %p215 = scmp.eq.s32.totalorder %s18, 0
      %p216 = por %p214, %p215
      %p217 = scmp.ne.s32.totalorder %s209, %s211
      %p218 = scmp.eq.s32.totalorder %s23, 1
      %p219 = por %p217, %p218
      %p220 = scmp.ne.s32.totalorder %s211, %s212
      %p221 = scmp.eq.s32.totalorder %s23, 0
      %p222 = por %p220, %p221
      %p223 = scmp.ne.s32.totalorder %s211, %s212
      %p224 = scmp.eq.s32.totalorder %s24, 1
      %p225 = por %p223, %p224
      %p227 = scmp.ne.s32.totalorder %s212, %s226
      %p228 = scmp.eq.s32.totalorder %s24, 0
      %p229 = por %p227, %p228
      %s230 = ssub.s32 %s18, %s25
      %p231 = scmp.eq.s32.totalorder %s230, 0
      %s233 = sadd.s32 %s232, 1
      %s234 = scalar_select %p231, %s232, %s233
      %p237 = pneg %p231
      %p238 = scmp.eq.s32.totalorder %s18, 1
      %p239 = por %p237, %p238
      %p240 = scmp.ne.s32.totalorder %s232, %s235
      %p241 = scmp.eq.s32.totalorder %s18, 0
      %p242 = por %p240, %p241
      %p243 = scmp.ne.s32.totalorder %s232, %s235
      %p244 = scmp.eq.s32.totalorder %s23, 1
      %p245 = por %p243, %p244
      %p246 = scmp.ne.s32.totalorder %s235, %s236
      %p247 = scmp.eq.s32.totalorder %s23, 0
      %p248 = por %p246, %p247
      %p249 = scmp.ne.s32.totalorder %s235, %s236
      %p250 = scmp.eq.s32.totalorder %s24, 1
      %p251 = por %p249, %p250
      %p253 = scmp.ne.s32.totalorder %s236, %s252
      %p254 = scmp.eq.s32.totalorder %s24, 0
      %p255 = por %p253, %p254
      %s256 = ssub.s32 %s18, %s25
      %p257 = scmp.eq.s32.totalorder %s256, 0
      %s259 = sadd.s32 %s258, 1
      %s260 = scalar_select %p257, %s258, %s259
      %p263 = pneg %p257
      %p264 = scmp.eq.s32.totalorder %s18, 1
      %p265 = por %p263, %p264
      %p266 = scmp.ne.s32.totalorder %s258, %s261
      %p267 = scmp.eq.s32.totalorder %s18, 0
      %p268 = por %p266, %p267
      %p269 = scmp.ne.s32.totalorder %s258, %s261
      %p270 = scmp.eq.s32.totalorder %s23, 1
      %p271 = por %p269, %p270
      %p272 = scmp.ne.s32.totalorder %s261, %s262
      %p273 = scmp.eq.s32.totalorder %s23, 0
      %p274 = por %p272, %p273
      %p275 = scmp.ne.s32.totalorder %s261, %s262
      %p276 = scmp.eq.s32.totalorder %s24, 1
      %p277 = por %p275, %p276
      %p279 = scmp.ne.s32.totalorder %s262, %s278
      %p280 = scmp.eq.s32.totalorder %s24, 0
      %p281 = por %p279, %p280
      %s282 = ssub.s32 %s18, %s25
      %p283 = scmp.eq.s32.totalorder %s282, 0
      %s285 = sadd.s32 %s284, 1
      %s286 = scalar_select %p283, %s284, %s285
      %p289 = pneg %p283
      %p290 = scmp.eq.s32.totalorder %s18, 1
      %p291 = por %p289, %p290
      %p292 = scmp.ne.s32.totalorder %s284, %s287
      %p293 = scmp.eq.s32.totalorder %s18, 0
      %p294 = por %p292, %p293
      %p295 = scmp.ne.s32.totalorder %s284, %s287
      %p296 = scmp.eq.s32.totalorder %s23, 1
      %p297 = por %p295, %p296
      %p298 = scmp.ne.s32.totalorder %s287, %s288
      %p299 = scmp.eq.s32.totalorder %s23, 0
      %p300 = por %p298, %p299
      %p301 = scmp.ne.s32.totalorder %s287, %s288
      %p302 = scmp.eq.s32.totalorder %s24, 1
      %p303 = por %p301, %p302
      %p305 = scmp.ne.s32.totalorder %s288, %s304
      %p306 = scmp.eq.s32.totalorder %s24, 0
      %p307 = por %p305, %p306
      %p308 = scmp.le.s32.totalorder 1, %s18
      %p309 = scmp.lt.s32.totalorder %s18, 3
      %p310 = pnand %p308, %p309
      %p311 = pneg %p310
      // Predicated region
      $region9: #{tpu_custom_call.1} parent=5 // pred_check
        _
      $region10: #{tpu_custom_call.1} parent=5 // pred_check_branch
        %313 = sbr.rel (%p310) target = $region12
      $region11: #{tpu_custom_call.1} parent=5 // pred_region
        %s314 = ssub.s32 %s18, 1
        // Predicated region
        $region13: #{tpu_custom_call.1} parent=11 // pred_check
          %p315 = pneg %p117
        $region14: #{tpu_custom_call.1} parent=11 // pred_check_branch
          %317 = sbr.rel (%p315) target = $region16
        $region15: #{tpu_custom_call.1} parent=11 // pred_region
          _
        $region16: #{tpu_custom_call.1} parent=11 // pred_fallthru
          _
        // Predicated region
        $region17: #{tpu_custom_call.1} parent=11 // pred_check
          %p318 = pneg %p138
        $region18: #{tpu_custom_call.1} parent=11 // pred_check_branch
          %320 = sbr.rel (%p318) target = $region20
        $region19: #{tpu_custom_call.1} parent=11 // pred_region
          _
        $region20: #{tpu_custom_call.1} parent=11 // pred_fallthru
          _
        // Predicated region
        $region21: #{tpu_custom_call.1} parent=11 // pred_check
          %p321 = pneg %p159
        $region22: #{tpu_custom_call.1} parent=11 // pred_check_branch
          %323 = sbr.rel (%p321) target = $region24
        $region23: #{tpu_custom_call.1} parent=11 // pred_region
          _
        $region24: #{tpu_custom_call.1} parent=11 // pred_fallthru
          _
        // Predicated region
        $region25: #{tpu_custom_call.1} parent=11 // pred_check
          %p324 = pneg %p180
        $region26: #{tpu_custom_call.1} parent=11 // pred_check_branch
          %326 = sbr.rel (%p324) target = $region28
        $region27: #{tpu_custom_call.1} parent=11 // pred_region
          _
        $region28: #{tpu_custom_call.1} parent=11 // pred_fallthru
          _
        // Predicated region
        $region29: #{tpu_custom_call.1} parent=11 // pred_check
          %p327 = pneg %p201
        $region30: #{tpu_custom_call.1} parent=11 // pred_check_branch
          %329 = sbr.rel (%p327) target = $region32
        $region31: #{tpu_custom_call.1} parent=11 // pred_region
          _
        $region32: #{tpu_custom_call.1} parent=11 // pred_fallthru
          _
        // Predicated region
        $region33: #{tpu_custom_call.1} parent=11 // pred_check
          %p330 = pneg %p222
        $region34: #{tpu_custom_call.1} parent=11 // pred_check_branch
          %332 = sbr.rel (%p330) target = $region36
        $region35: #{tpu_custom_call.1} parent=11 // pred_region
          _
        $region36: #{tpu_custom_call.1} parent=11 // pred_fallthru
          _
      $region12: #{tpu_custom_call.1} parent=5 // pred_fallthru
        _
      %p333 = scmp.lt.s32.totalorder %s18, 2
      // Predicated region
      $region37: #{tpu_custom_call.1} parent=5 // pred_check
        %p334 = pneg %p333
      $region38: #{tpu_custom_call.1} parent=5 // pred_check_branch
        %336 = sbr.rel (%p334) target = $region40
      $region39: #{tpu_custom_call.1} parent=5 // pred_region
        // Predicated region
        $region41: #{tpu_custom_call.1} parent=39 // pred_check
          %p337 = pneg %p38
        $region42: #{tpu_custom_call.1} parent=39 // pred_check_branch
          %339 = sbr.rel (%p337) target = $region44
        $region43: #{tpu_custom_call.1} parent=39 // pred_region
          %p340 = scmp.lt.s32.totalorder %s18, 1
          %s341 = scalar_select %p340, %s18, 1
          %s342 = smul.addr %s341, 8
          %s343 = scalar_lea.vmem %s0, %s342
        $region44: #{tpu_custom_call.1} parent=39 // pred_fallthru
          _
        // Predicated region
        $region45: #{tpu_custom_call.1} parent=39 // pred_check
          %p344 = pneg %p64
        $region46: #{tpu_custom_call.1} parent=39 // pred_check_branch
          %346 = sbr.rel (%p344) target = $region48
        $region47: #{tpu_custom_call.1} parent=39 // pred_region
          %p347 = scmp.lt.s32.totalorder %s18, 1
          %s348 = scalar_select %p347, %s18, 1
          %s349 = smul.addr %s348, 8
          %s350 = scalar_lea.vmem %s1, %s349
        $region48: #{tpu_custom_call.1} parent=39 // pred_fallthru
          _
        // Predicated region
        $region49: #{tpu_custom_call.1} parent=39 // pred_check
          %p351 = pneg %p90
        $region50: #{tpu_custom_call.1} parent=39 // pred_check_branch
          %353 = sbr.rel (%p351) target = $region52
        $region51: #{tpu_custom_call.1} parent=39 // pred_region
          %p354 = scmp.lt.s32.totalorder %s18, 1
          %s355 = scalar_select %p354, %s18, 1
          %s356 = smul.addr %s355, 8
          %s357 = scalar_lea.vmem %s2, %s356
        $region52: #{tpu_custom_call.1} parent=39 // pred_fallthru
          _
      $region40: #{tpu_custom_call.1} parent=5 // pred_fallthru
        _
      %p358 = scmp.le.s32.totalorder 1, %s18
      %p359 = scmp.lt.s32.totalorder %s18, 3
      %p360 = pnand %p358, %p359
      %p361 = pneg %p360
      // Predicated region
      $region53: #{tpu_custom_call.1} parent=5 // pred_check
        _
      $region54: #{tpu_custom_call.1} parent=5 // pred_check_branch
        %363 = sbr.rel (%p360) target = $region56
      $region55: #{tpu_custom_call.1} parent=5 // pred_region
        %s364 = ssub.s32 %s18, 1
        %p365 = scmp.lt.s32.totalorder %s23, 1
        %s366 = scalar_select %p365, %s23, 1
        %s367 = smul.addr %s366, 8
        %s368 = scalar_lea.vmem %s0, %s367
        %p369 = pneg %p44
        %p370 = pneg %p41
        %p371 = scmp.lt.s32.totalorder %s23, 1
        %s372 = scalar_select %p371, %s23, 1
        %s373 = smul.addr %s372, 8
        %s374 = scalar_lea.vmem %s1, %s373
        %p375 = pneg %p70
        %p376 = pneg %p67
        %p377 = scmp.lt.s32.totalorder %s23, 1
        %s378 = scalar_select %p377, %s23, 1
        %s379 = smul.addr %s378, 8
        %s380 = scalar_lea.vmem %s2, %s379
        %p381 = pneg %p96
        %p382 = pneg %p93
        %p383 = pneg %p117
        %p384 = pneg %p114
        %p385 = pneg %p138
        %p386 = pneg %p135
        %p387 = pneg %p159
        %p388 = pneg %p156
        %p389 = pneg %p180
        %p390 = pneg %p177
        %p391 = pneg %p201
        %p392 = pneg %p198
        %p393 = pneg %p222
        %p394 = pneg %p219
        %p395 = pneg %p248
        %p396 = pneg %p245
        %s397 = sand.u32 %s235, 1
        %s398 = sand.u32 %s235, 1
        %s399 = smul.addr %s398, 16
        %s400 = scalar_lea.vmem [#allocation2], %s399
        %p401 = pneg %p274
        %p402 = pneg %p271
        %s403 = sand.u32 %s261, 1
        %s404 = sand.u32 %s261, 1
        %s405 = smul.addr %s404, 16
        %s406 = scalar_lea.vmem [#allocation3], %s405
        %p407 = pneg %p300
        %p408 = pneg %p297
        %s409 = sand.u32 %s287, 1
        %s410 = sand.u32 %s287, 1
        %s411 = smul.addr %s410, 16
        %s412 = scalar_lea.vmem [#allocation4], %s411
        %p413 = scmp.lt.s32.totalorder %s23, 1
        %s414 = scalar_select %p413, %s23, 1
        %s415 = smul.addr %s414, 8
        %s416 = scalar_lea.vmem %s0, %s415
        %p417 = scmp.lt.s32.totalorder %s23, 1
        %s418 = scalar_select %p417, %s23, 1
        %s419 = smul.addr %s418, 8
        %s420 = scalar_lea.vmem %s1, %s419
        %p421 = scmp.lt.s32.totalorder %s23, 1
        %s422 = scalar_select %p421, %s23, 1
        %s423 = smul.addr %s422, 8
        %s424 = scalar_lea.vmem %s2, %s423
        %v426 = vld [vmem:[%s416] sm:$0xff]
        %v427 = vpack.c.bf16 %v426, %v426
        %v428 = vld [vmem:[%s420] sm:$0xff]
        %v429 = vpack.c.bf16 %v428, %v428
        %v430 = vld [vmem:[%s424] sm:$0xff]
        %v431 = vpack.c.bf16 %v430, %v430
        %v432 = vld [vmem:[%s3] sm:$0xf]
        %v433 = vld [vmem:[%s3 + $0x4] sm:$0xf]
        %v434 = vld [vmem:[%s3 + $0x8] sm:$0xf]
        %v435 = vld [vmem:[%s3 + $0xc] sm:$0xf]
        %v436 = vld [vmem:[%s4] sm:$0x1]
        %v437 = vunpack.c.l.bf16 %v436
        %v438 = vlaneseq
        %v439 = vshrl.u32 %v438, 7
        %v440 = vsub.s32 0, %v439
        %v441 = vrot.slane %v437, %v440
        %v446 = vunpack.c.l.b16 %v432
        %v447 = vunpack.c.l.b16 %v433
        %v448 = vunpack.c.l.b16 %v434
        %v449 = vunpack.c.l.b16 %v435
        %v450 = vpack.c.b16 %v447, %v446
        %v451 = vpack.c.b16 %v449, %v448
        %vm454 = vcmask 261120
        %v456 = vsel %vm454, %v427, 0
        %458 = vmatprep.subr.bf16.mxu0 0
        %459 = vmatpush1.bf16.msra.mxu0 0
        %460 = vmatprep.subr.bf16.mxu0 0
        %461 = vmatpush1.bf16.msra.mxu0 0
        %462 = vmatprep.subr.bf16.mxu0 0
        %463 = vmatpush1.bf16.msra.mxu0 0
        %464 = vmatprep.subr.bf16.mxu0 0
        %465 = vmatpush1.bf16.msra.mxu0 0
        %466 = vmatprep.subr.bf16.mxu0 0
        %467 = vmatpush1.bf16.msra.mxu0 0
        %468 = vmatprep.subr.bf16.mxu0 0
        %469 = vmatpush1.bf16.msra.mxu0 0
        %470 = vmatprep.subr.bf16.mxu0 0
        %471 = vmatpush1.bf16.msra.mxu0 %v451
        %472 = vmatprep.subr.bf16.mxu0 0
        %473 = vmatpush1.bf16.msra.mxu0 %v450
        %474 = vmatprep.subr.bf16.mxu0 0
        %475 = vmatpush2.bf16.msra.mxu0 0
        %476 = vmatprep.subr.bf16.mxu0 0
        %477 = vmatpush2.bf16.msra.mxu0 0
        %478 = vmatprep.subr.bf16.mxu0 0
        %479 = vmatpush2.bf16.msra.mxu0 0
        %480 = vmatprep.subr.bf16.mxu0 0
        %481 = vmatpush2.bf16.msra.mxu0 0
        %482 = vmatprep.subr.bf16.mxu0 0
        %483 = vmatpush2.bf16.msra.mxu0 0
        %484 = vmatprep.subr.bf16.mxu0 0
        %485 = vmatpush2.bf16.msra.mxu0 0
        %486 = vmatprep.subr.bf16.mxu0 0
        %487 = vmatpush2.bf16.msra.mxu0 0
        %488 = vmatprep.subr.bf16.mxu0 0
        %489 = vmatpush2.bf16.msra.mxu0 0
        %490 = vmatprep.mubr.bf16.mxu0 0
        %491 = vmatmul.mubr.bf16.gmra.mxu0 %v456
        %v492 = vpop.f32.mrf.mxu0
        %v493 = vadd.f32 %v441, %v492
        %v494 = vpop.f32.mrf.mxu0
        %v495 = vpop.f32.mrf.mxu0
        %v496 = vpop.f32.mrf.mxu0
        %497 = vdwg.mxu0
        %v498 = vpack.c.bf16 %v493, %v493
        %vm499 = vcmask 60416
        %500 = vst.msk [vmem:[%s400] sm:$0xf] %vm499, %v498
        %s501 = scalar_lea.vmem %s3, 16
        %v502 = vld [vmem:[%s501] sm:$0xf]
        %v503 = vld [vmem:[%s501 + $0x4] sm:$0xf]
        %v504 = vld [vmem:[%s501 + $0x8] sm:$0xf]
        %v505 = vld [vmem:[%s501 + $0xc] sm:$0xf]
        %s506 = scalar_lea.vmem %s4, 1
        %v507 = vld [vmem:[%s506] sm:$0x1]
        %v508 = vunpack.c.l.bf16 %v507
        %v509 = vlaneseq
        %v510 = vshrl.u32 %v509, 7
        %v511 = vsub.s32 0, %v510
        %v512 = vrot.slane %v508, %v511
        %v517 = vunpack.c.l.b16 %v502
        %v518 = vunpack.c.l.b16 %v503
        %v519 = vunpack.c.l.b16 %v504
        %v520 = vunpack.c.l.b16 %v505
        %v521 = vpack.c.b16 %v518, %v517
        %v522 = vpack.c.b16 %v520, %v519
        %525 = vmatprep.subr.bf16.mxu0 0
        %526 = vmatpush1.bf16.msra.mxu0 0
        %527 = vmatprep.subr.bf16.mxu0 0
        %528 = vmatpush1.bf16.msra.mxu0 0
        %529 = vmatprep.subr.bf16.mxu0 0
        %530 = vmatpush1.bf16.msra.mxu0 0
        %531 = vmatprep.subr.bf16.mxu0 0
        %532 = vmatpush1.bf16.msra.mxu0 0
        %533 = vmatprep.subr.bf16.mxu0 0
        %534 = vmatpush1.bf16.msra.mxu0 0
        %535 = vmatprep.subr.bf16.mxu0 0
        %536 = vmatpush1.bf16.msra.mxu0 0
        %537 = vmatprep.subr.bf16.mxu0 0
        %538 = vmatpush1.bf16.msra.mxu0 %v522
        %539 = vmatprep.subr.bf16.mxu0 0
        %540 = vmatpush1.bf16.msra.mxu0 %v521
        %541 = vmatprep.subr.bf16.mxu0 0
        %542 = vmatpush2.bf16.msra.mxu0 0
        %543 = vmatprep.subr.bf16.mxu0 0
        %544 = vmatpush2.bf16.msra.mxu0 0
        %545 = vmatprep.subr.bf16.mxu0 0
        %546 = vmatpush2.bf16.msra.mxu0 0
        %547 = vmatprep.subr.bf16.mxu0 0
        %548 = vmatpush2.bf16.msra.mxu0 0
        %549 = vmatprep.subr.bf16.mxu0 0
        %550 = vmatpush2.bf16.msra.mxu0 0
        %551 = vmatprep.subr.bf16.mxu0 0
        %552 = vmatpush2.bf16.msra.mxu0 0
        %553 = vmatprep.subr.bf16.mxu0 0
        %554 = vmatpush2.bf16.msra.mxu0 0
        %555 = vmatprep.subr.bf16.mxu0 0
        %556 = vmatpush2.bf16.msra.mxu0 0
        %557 = vmatprep.mubr.bf16.mxu0 0
        %558 = vmatmul.mubr.bf16.gmra.mxu0 %v456
        %v559 = vpop.f32.mrf.mxu0
        %v560 = vadd.f32 %v512, %v559
        %v561 = vpop.f32.mrf.mxu0
        %v562 = vpop.f32.mrf.mxu0
        %v563 = vpop.f32.mrf.mxu0
        %564 = vdwg.mxu0
        %v565 = vpack.c.bf16 %v560, %v560
        %s566 = scalar_lea.vmem %s400, 4 [#allocation2]
        %567 = vst.msk [vmem:[%s566] sm:$0xf] %vm499, %v565
        %s568 = scalar_lea.vmem %s3, 32
        %v569 = vld [vmem:[%s568] sm:$0xf]
        %v570 = vld [vmem:[%s568 + $0x4] sm:$0xf]
        %v571 = vld [vmem:[%s568 + $0x8] sm:$0xf]
        %v572 = vld [vmem:[%s568 + $0xc] sm:$0xf]
        %s573 = scalar_lea.vmem %s4, 2
        %v574 = vld [vmem:[%s573] sm:$0x1]
        %v575 = vunpack.c.l.bf16 %v574
        %v576 = vlaneseq
        %v577 = vshrl.u32 %v576, 7
        %v578 = vsub.s32 0, %v577
        %v579 = vrot.slane %v575, %v578
        %v584 = vunpack.c.l.b16 %v569
        %v585 = vunpack.c.l.b16 %v570
        %v586 = vunpack.c.l.b16 %v571
        %v587 = vunpack.c.l.b16 %v572
        %v588 = vpack.c.b16 %v585, %v584
        %v589 = vpack.c.b16 %v587, %v586
        %592 = vmatprep.subr.bf16.mxu0 0
        %593 = vmatpush1.bf16.msra.mxu0 0
        %594 = vmatprep.subr.bf16.mxu0 0
        %595 = vmatpush1.bf16.msra.mxu0 0
        %596 = vmatprep.subr.bf16.mxu0 0
        %597 = vmatpush1.bf16.msra.mxu0 0
        %598 = vmatprep.subr.bf16.mxu0 0
        %599 = vmatpush1.bf16.msra.mxu0 0
        %600 = vmatprep.subr.bf16.mxu0 0
        %601 = vmatpush1.bf16.msra.mxu0 0
        %602 = vmatprep.subr.bf16.mxu0 0
        %603 = vmatpush1.bf16.msra.mxu0 0
        %604 = vmatprep.subr.bf16.mxu0 0
        %605 = vmatpush1.bf16.msra.mxu0 %v589
        %606 = vmatprep.subr.bf16.mxu0 0
        %607 = vmatpush1.bf16.msra.mxu0 %v588
        %608 = vmatprep.subr.bf16.mxu0 0
        %609 = vmatpush2.bf16.msra.mxu0 0
        %610 = vmatprep.subr.bf16.mxu0 0
        %611 = vmatpush2.bf16.msra.mxu0 0
        %612 = vmatprep.subr.bf16.mxu0 0
        %613 = vmatpush2.bf16.msra.mxu0 0
        %614 = vmatprep.subr.bf16.mxu0 0
        %615 = vmatpush2.bf16.msra.mxu0 0
        %616 = vmatprep.subr.bf16.mxu0 0
        %617 = vmatpush2.bf16.msra.mxu0 0
        %618 = vmatprep.subr.bf16.mxu0 0
        %619 = vmatpush2.bf16.msra.mxu0 0
        %620 = vmatprep.subr.bf16.mxu0 0
        %621 = vmatpush2.bf16.msra.mxu0 0
        %622 = vmatprep.subr.bf16.mxu0 0
        %623 = vmatpush2.bf16.msra.mxu0 0
        %624 = vmatprep.mubr.bf16.mxu0 0
        %625 = vmatmul.mubr.bf16.gmra.mxu0 %v456
        %v626 = vpop.f32.mrf.mxu0
        %v627 = vadd.f32 %v579, %v626
        %v628 = vpop.f32.mrf.mxu0
        %v629 = vpop.f32.mrf.mxu0
        %v630 = vpop.f32.mrf.mxu0
        %631 = vdwg.mxu0
        %v632 = vpack.c.bf16 %v627, %v627
        %s633 = scalar_lea.vmem %s400, 8 [#allocation2]
        %634 = vst.msk [vmem:[%s633] sm:$0xf] %vm499, %v632
        %s635 = scalar_lea.vmem %s3, 48
        %v636 = vld [vmem:[%s635] sm:$0xf]
        %v637 = vld [vmem:[%s635 + $0x4] sm:$0xf]
        %v638 = vld [vmem:[%s635 + $0x8] sm:$0xf]
        %v639 = vld [vmem:[%s635 + $0xc] sm:$0xf]
        %s640 = scalar_lea.vmem %s4, 3
        %v641 = vld [vmem:[%s640] sm:$0x1]
        %v642 = vunpack.c.l.bf16 %v641
        %v643 = vlaneseq
        %v644 = vshrl.u32 %v643, 7
        %v645 = vsub.s32 0, %v644
        %v646 = vrot.slane %v642, %v645
        %v651 = vunpack.c.l.b16 %v636
        %v652 = vunpack.c.l.b16 %v637
        %v653 = vunpack.c.l.b16 %v638
        %v654 = vunpack.c.l.b16 %v639
        %v655 = vpack.c.b16 %v652, %v651
        %v656 = vpack.c.b16 %v654, %v653
        %659 = vmatprep.subr.bf16.mxu0 0
        %660 = vmatpush1.bf16.msra.mxu0 0
        %661 = vmatprep.subr.bf16.mxu0 0
        %662 = vmatpush1.bf16.msra.mxu0 0
        %663 = vmatprep.subr.bf16.mxu0 0
        %664 = vmatpush1.bf16.msra.mxu0 0
        %665 = vmatprep.subr.bf16.mxu0 0
        %666 = vmatpush1.bf16.msra.mxu0 0
        %667 = vmatprep.subr.bf16.mxu0 0
        %668 = vmatpush1.bf16.msra.mxu0 0
        %669 = vmatprep.subr.bf16.mxu0 0
        %670 = vmatpush1.bf16.msra.mxu0 0
        %671 = vmatprep.subr.bf16.mxu0 0
        %672 = vmatpush1.bf16.msra.mxu0 %v656
        %673 = vmatprep.subr.bf16.mxu0 0
        %674 = vmatpush1.bf16.msra.mxu0 %v655
        %675 = vmatprep.subr.bf16.mxu0 0
        %676 = vmatpush2.bf16.msra.mxu0 0
        %677 = vmatprep.subr.bf16.mxu0 0
        %678 = vmatpush2.bf16.msra.mxu0 0
        %679 = vmatprep.subr.bf16.mxu0 0
        %680 = vmatpush2.bf16.msra.mxu0 0
        %681 = vmatprep.subr.bf16.mxu0 0
        %682 = vmatpush2.bf16.msra.mxu0 0
        %683 = vmatprep.subr.bf16.mxu0 0
        %684 = vmatpush2.bf16.msra.mxu0 0
        %685 = vmatprep.subr.bf16.mxu0 0
        %686 = vmatpush2.bf16.msra.mxu0 0
        %687 = vmatprep.subr.bf16.mxu0 0
        %688 = vmatpush2.bf16.msra.mxu0 0
        %689 = vmatprep.subr.bf16.mxu0 0
        %690 = vmatpush2.bf16.msra.mxu0 0
        %691 = vmatprep.mubr.bf16.mxu0 0
        %692 = vmatmul.mubr.bf16.gmra.mxu0 %v456
        %v693 = vpop.f32.mrf.mxu0
        %v694 = vadd.f32 %v646, %v693
        %v695 = vpop.f32.mrf.mxu0
        %v696 = vpop.f32.mrf.mxu0
        %v697 = vpop.f32.mrf.mxu0
        %698 = vdwg.mxu0
        %v699 = vpack.c.bf16 %v694, %v694
        %s700 = scalar_lea.vmem %s400, 12 [#allocation2]
        %701 = vst.msk [vmem:[%s700] sm:$0xf] %vm499, %v699
        %v702 = vld [vmem:[%s5] sm:$0xf]
        %v703 = vld [vmem:[%s5 + $0x4] sm:$0xf]
        %v704 = vld [vmem:[%s5 + $0x8] sm:$0xf]
        %v705 = vld [vmem:[%s5 + $0xc] sm:$0xf]
        %v706 = vld [vmem:[%s6] sm:$0x1]
        %v707 = vunpack.c.l.bf16 %v706
        %v708 = vlaneseq
        %v709 = vshrl.u32 %v708, 7
        %v710 = vsub.s32 0, %v709
        %v711 = vrot.slane %v707, %v710
        %v716 = vunpack.c.l.b16 %v702
        %v717 = vunpack.c.l.b16 %v703
        %v718 = vunpack.c.l.b16 %v704
        %v719 = vunpack.c.l.b16 %v705
        %v720 = vpack.c.b16 %v717, %v716
        %v721 = vpack.c.b16 %v719, %v718
        %v725 = vsel %vm454, %v429, 0
        %727 = vmatprep.subr.bf16.mxu0 0
        %728 = vmatpush1.bf16.msra.mxu0 0
        %729 = vmatprep.subr.bf16.mxu0 0
        %730 = vmatpush1.bf16.msra.mxu0 0
        %731 = vmatprep.subr.bf16.mxu0 0
        %732 = vmatpush1.bf16.msra.mxu0 0
        %733 = vmatprep.subr.bf16.mxu0 0
        %734 = vmatpush1.bf16.msra.mxu0 0
        %735 = vmatprep.subr.bf16.mxu0 0
        %736 = vmatpush1.bf16.msra.mxu0 0
        %737 = vmatprep.subr.bf16.mxu0 0
        %738 = vmatpush1.bf16.msra.mxu0 0
        %739 = vmatprep.subr.bf16.mxu0 0
        %740 = vmatpush1.bf16.msra.mxu0 %v721
        %741 = vmatprep.subr.bf16.mxu0 0
        %742 = vmatpush1.bf16.msra.mxu0 %v720
        %743 = vmatprep.subr.bf16.mxu0 0
        %744 = vmatpush2.bf16.msra.mxu0 0
        %745 = vmatprep.subr.bf16.mxu0 0
        %746 = vmatpush2.bf16.msra.mxu0 0
        %747 = vmatprep.subr.bf16.mxu0 0
        %748 = vmatpush2.bf16.msra.mxu0 0
        %749 = vmatprep.subr.bf16.mxu0 0
        %750 = vmatpush2.bf16.msra.mxu0 0
        %751 = vmatprep.subr.bf16.mxu0 0
        %752 = vmatpush2.bf16.msra.mxu0 0
        %753 = vmatprep.subr.bf16.mxu0 0
        %754 = vmatpush2.bf16.msra.mxu0 0
        %755 = vmatprep.subr.bf16.mxu0 0
        %756 = vmatpush2.bf16.msra.mxu0 0
        %757 = vmatprep.subr.bf16.mxu0 0
        %758 = vmatpush2.bf16.msra.mxu0 0
        %759 = vmatprep.mubr.bf16.mxu0 0
        %760 = vmatmul.mubr.bf16.gmra.mxu0 %v725
        %v761 = vpop.f32.mrf.mxu0
        %v762 = vadd.f32 %v711, %v761
        %v763 = vpop.f32.mrf.mxu0
        %v764 = vpop.f32.mrf.mxu0
        %v765 = vpop.f32.mrf.mxu0
        %766 = vdwg.mxu0
        %v767 = vpack.c.bf16 %v762, %v762
        %768 = vst.msk [vmem:[%s406] sm:$0xf] %vm499, %v767
        %s769 = scalar_lea.vmem %s5, 16
        %v770 = vld [vmem:[%s769] sm:$0xf]
        %v771 = vld [vmem:[%s769 + $0x4] sm:$0xf]
        %v772 = vld [vmem:[%s769 + $0x8] sm:$0xf]
        %v773 = vld [vmem:[%s769 + $0xc] sm:$0xf]
        %s774 = scalar_lea.vmem %s6, 1
        %v775 = vld [vmem:[%s774] sm:$0x1]
        %v776 = vunpack.c.l.bf16 %v775
        %v777 = vlaneseq
        %v778 = vshrl.u32 %v777, 7
        %v779 = vsub.s32 0, %v778
        %v780 = vrot.slane %v776, %v779
        %v785 = vunpack.c.l.b16 %v770
        %v786 = vunpack.c.l.b16 %v771
        %v787 = vunpack.c.l.b16 %v772
        %v788 = vunpack.c.l.b16 %v773
        %v789 = vpack.c.b16 %v786, %v785
        %v790 = vpack.c.b16 %v788, %v787
        %793 = vmatprep.subr.bf16.mxu0 0
        %794 = vmatpush1.bf16.msra.mxu0 0
        %795 = vmatprep.subr.bf16.mxu0 0
        %796 = vmatpush1.bf16.msra.mxu0 0
        %797 = vmatprep.subr.bf16.mxu0 0
        %798 = vmatpush1.bf16.msra.mxu0 0
        %799 = vmatprep.subr.bf16.mxu0 0
        %800 = vmatpush1.bf16.msra.mxu0 0
        %801 = vmatprep.subr.bf16.mxu0 0
        %802 = vmatpush1.bf16.msra.mxu0 0
        %803 = vmatprep.subr.bf16.mxu0 0
        %804 = vmatpush1.bf16.msra.mxu0 0
        %805 = vmatprep.subr.bf16.mxu0 0
        %806 = vmatpush1.bf16.msra.mxu0 %v790
        %807 = vmatprep.subr.bf16.mxu0 0
        %808 = vmatpush1.bf16.msra.mxu0 %v789
        %809 = vmatprep.subr.bf16.mxu0 0
        %810 = vmatpush2.bf16.msra.mxu0 0
        %811 = vmatprep.subr.bf16.mxu0 0
        %812 = vmatpush2.bf16.msra.mxu0 0
        %813 = vmatprep.subr.bf16.mxu0 0
        %814 = vmatpush2.bf16.msra.mxu0 0
        %815 = vmatprep.subr.bf16.mxu0 0
        %816 = vmatpush2.bf16.msra.mxu0 0
        %817 = vmatprep.subr.bf16.mxu0 0
        %818 = vmatpush2.bf16.msra.mxu0 0
        %819 = vmatprep.subr.bf16.mxu0 0
        %820 = vmatpush2.bf16.msra.mxu0 0
        %821 = vmatprep.subr.bf16.mxu0 0
        %822 = vmatpush2.bf16.msra.mxu0 0
        %823 = vmatprep.subr.bf16.mxu0 0
        %824 = vmatpush2.bf16.msra.mxu0 0
        %825 = vmatprep.mubr.bf16.mxu0 0
        %826 = vmatmul.mubr.bf16.gmra.mxu0 %v725
        %v827 = vpop.f32.mrf.mxu0
        %v828 = vadd.f32 %v780, %v827
        %v829 = vpop.f32.mrf.mxu0
        %v830 = vpop.f32.mrf.mxu0
        %v831 = vpop.f32.mrf.mxu0
        %832 = vdwg.mxu0
        %v833 = vpack.c.bf16 %v828, %v828
        %s834 = scalar_lea.vmem %s406, 4 [#allocation3]
        %835 = vst.msk [vmem:[%s834] sm:$0xf] %vm499, %v833
        %s836 = scalar_lea.vmem %s5, 32
        %v837 = vld [vmem:[%s836] sm:$0xf]
        %v838 = vld [vmem:[%s836 + $0x4] sm:$0xf]
        %v839 = vld [vmem:[%s836 + $0x8] sm:$0xf]
        %v840 = vld [vmem:[%s836 + $0xc] sm:$0xf]
        %s841 = scalar_lea.vmem %s6, 2
        %v842 = vld [vmem:[%s841] sm:$0x1]
        %v843 = vunpack.c.l.bf16 %v842
        %v844 = vlaneseq
        %v845 = vshrl.u32 %v844, 7
        %v846 = vsub.s32 0, %v845
        %v847 = vrot.slane %v843, %v846
        %v852 = vunpack.c.l.b16 %v837
        %v853 = vunpack.c.l.b16 %v838
        %v854 = vunpack.c.l.b16 %v839
        %v855 = vunpack.c.l.b16 %v840
        %v856 = vpack.c.b16 %v853, %v852
        %v857 = vpack.c.b16 %v855, %v854
        %860 = vmatprep.subr.bf16.mxu0 0
        %861 = vmatpush1.bf16.msra.mxu0 0
        %862 = vmatprep.subr.bf16.mxu0 0
        %863 = vmatpush1.bf16.msra.mxu0 0
        %864 = vmatprep.subr.bf16.mxu0 0
        %865 = vmatpush1.bf16.msra.mxu0 0
        %866 = vmatprep.subr.bf16.mxu0 0
        %867 = vmatpush1.bf16.msra.mxu0 0
        %868 = vmatprep.subr.bf16.mxu0 0
        %869 = vmatpush1.bf16.msra.mxu0 0
        %870 = vmatprep.subr.bf16.mxu0 0
        %871 = vmatpush1.bf16.msra.mxu0 0
        %872 = vmatprep.subr.bf16.mxu0 0
        %873 = vmatpush1.bf16.msra.mxu0 %v857
        %874 = vmatprep.subr.bf16.mxu0 0
        %875 = vmatpush1.bf16.msra.mxu0 %v856
        %876 = vmatprep.subr.bf16.mxu0 0
        %877 = vmatpush2.bf16.msra.mxu0 0
        %878 = vmatprep.subr.bf16.mxu0 0
        %879 = vmatpush2.bf16.msra.mxu0 0
        %880 = vmatprep.subr.bf16.mxu0 0
        %881 = vmatpush2.bf16.msra.mxu0 0
        %882 = vmatprep.subr.bf16.mxu0 0
        %883 = vmatpush2.bf16.msra.mxu0 0
        %884 = vmatprep.subr.bf16.mxu0 0
        %885 = vmatpush2.bf16.msra.mxu0 0
        %886 = vmatprep.subr.bf16.mxu0 0
        %887 = vmatpush2.bf16.msra.mxu0 0
        %888 = vmatprep.subr.bf16.mxu0 0
        %889 = vmatpush2.bf16.msra.mxu0 0
        %890 = vmatprep.subr.bf16.mxu0 0
        %891 = vmatpush2.bf16.msra.mxu0 0
        %892 = vmatprep.mubr.bf16.mxu0 0
        %893 = vmatmul.mubr.bf16.gmra.mxu0 %v725
        %v894 = vpop.f32.mrf.mxu0
        %v895 = vadd.f32 %v847, %v894
        %v896 = vpop.f32.mrf.mxu0
        %v897 = vpop.f32.mrf.mxu0
        %v898 = vpop.f32.mrf.mxu0
        %899 = vdwg.mxu0
        %v900 = vpack.c.bf16 %v895, %v895
        %s901 = scalar_lea.vmem %s406, 8 [#allocation3]
        %902 = vst.msk [vmem:[%s901] sm:$0xf] %vm499, %v900
        %s903 = scalar_lea.vmem %s5, 48
        %v904 = vld [vmem:[%s903] sm:$0xf]
        %v905 = vld [vmem:[%s903 + $0x4] sm:$0xf]
        %v906 = vld [vmem:[%s903 + $0x8] sm:$0xf]
        %v907 = vld [vmem:[%s903 + $0xc] sm:$0xf]
        %s908 = scalar_lea.vmem %s6, 3
        %v909 = vld [vmem:[%s908] sm:$0x1]
        %v910 = vunpack.c.l.bf16 %v909
        %v911 = vlaneseq
        %v912 = vshrl.u32 %v911, 7
        %v913 = vsub.s32 0, %v912
        %v914 = vrot.slane %v910, %v913
        %v919 = vunpack.c.l.b16 %v904
        %v920 = vunpack.c.l.b16 %v905
        %v921 = vunpack.c.l.b16 %v906
        %v922 = vunpack.c.l.b16 %v907
        %v923 = vpack.c.b16 %v920, %v919
        %v924 = vpack.c.b16 %v922, %v921
        %927 = vmatprep.subr.bf16.mxu0 0
        %928 = vmatpush1.bf16.msra.mxu0 0
        %929 = vmatprep.subr.bf16.mxu0 0
        %930 = vmatpush1.bf16.msra.mxu0 0
        %931 = vmatprep.subr.bf16.mxu0 0
        %932 = vmatpush1.bf16.msra.mxu0 0
        %933 = vmatprep.subr.bf16.mxu0 0
        %934 = vmatpush1.bf16.msra.mxu0 0
        %935 = vmatprep.subr.bf16.mxu0 0
        %936 = vmatpush1.bf16.msra.mxu0 0
        %937 = vmatprep.subr.bf16.mxu0 0
        %938 = vmatpush1.bf16.msra.mxu0 0
        %939 = vmatprep.subr.bf16.mxu0 0
        %940 = vmatpush1.bf16.msra.mxu0 %v924
        %941 = vmatprep.subr.bf16.mxu0 0
        %942 = vmatpush1.bf16.msra.mxu0 %v923
        %943 = vmatprep.subr.bf16.mxu0 0
        %944 = vmatpush2.bf16.msra.mxu0 0
        %945 = vmatprep.subr.bf16.mxu0 0
        %946 = vmatpush2.bf16.msra.mxu0 0
        %947 = vmatprep.subr.bf16.mxu0 0
        %948 = vmatpush2.bf16.msra.mxu0 0
        %949 = vmatprep.subr.bf16.mxu0 0
        %950 = vmatpush2.bf16.msra.mxu0 0
        %951 = vmatprep.subr.bf16.mxu0 0
        %952 = vmatpush2.bf16.msra.mxu0 0
        %953 = vmatprep.subr.bf16.mxu0 0
        %954 = vmatpush2.bf16.msra.mxu0 0
        %955 = vmatprep.subr.bf16.mxu0 0
        %956 = vmatpush2.bf16.msra.mxu0 0
        %957 = vmatprep.subr.bf16.mxu0 0
        %958 = vmatpush2.bf16.msra.mxu0 0
        %959 = vmatprep.mubr.bf16.mxu0 0
        %960 = vmatmul.mubr.bf16.gmra.mxu0 %v725
        %v961 = vpop.f32.mrf.mxu0
        %v962 = vadd.f32 %v914, %v961
        %v963 = vpop.f32.mrf.mxu0
        %v964 = vpop.f32.mrf.mxu0
        %v965 = vpop.f32.mrf.mxu0
        %966 = vdwg.mxu0
        %v967 = vpack.c.bf16 %v962, %v962
        %s968 = scalar_lea.vmem %s406, 12 [#allocation3]
        %969 = vst.msk [vmem:[%s968] sm:$0xf] %vm499, %v967
        %v970 = vld [vmem:[%s7] sm:$0xf]
        %v971 = vld [vmem:[%s7 + $0x4] sm:$0xf]
        %v972 = vld [vmem:[%s7 + $0x8] sm:$0xf]
        %v973 = vld [vmem:[%s7 + $0xc] sm:$0xf]
        %v974 = vld [vmem:[%s8] sm:$0x1]
        %v975 = vunpack.c.l.bf16 %v974
        %v976 = vlaneseq
        %v977 = vshrl.u32 %v976, 7
        %v978 = vsub.s32 0, %v977
        %v979 = vrot.slane %v975, %v978
        %v984 = vunpack.c.l.b16 %v970
        %v985 = vunpack.c.l.b16 %v971
        %v986 = vunpack.c.l.b16 %v972
        %v987 = vunpack.c.l.b16 %v973
        %v988 = vpack.c.b16 %v985, %v984
        %v989 = vpack.c.b16 %v987, %v986
        %v993 = vsel %vm454, %v431, 0
        %995 = vmatprep.subr.bf16.mxu0 0
        %996 = vmatpush1.bf16.msra.mxu0 0
        %997 = vmatprep.subr.bf16.mxu0 0
        %998 = vmatpush1.bf16.msra.mxu0 0
        %999 = vmatprep.subr.bf16.mxu0 0
        %1000 = vmatpush1.bf16.msra.mxu0 0
        %1001 = vmatprep.subr.bf16.mxu0 0
        %1002 = vmatpush1.bf16.msra.mxu0 0
        %1003 = vmatprep.subr.bf16.mxu0 0
        %1004 = vmatpush1.bf16.msra.mxu0 0
        %1005 = vmatprep.subr.bf16.mxu0 0
        %1006 = vmatpush1.bf16.msra.mxu0 0
        %1007 = vmatprep.subr.bf16.mxu0 0
        %1008 = vmatpush1.bf16.msra.mxu0 %v989
        %1009 = vmatprep.subr.bf16.mxu0 0
        %1010 = vmatpush1.bf16.msra.mxu0 %v988
        %1011 = vmatprep.subr.bf16.mxu0 0
        %1012 = vmatpush2.bf16.msra.mxu0 0
        %1013 = vmatprep.subr.bf16.mxu0 0
        %1014 = vmatpush2.bf16.msra.mxu0 0
        %1015 = vmatprep.subr.bf16.mxu0 0
        %1016 = vmatpush2.bf16.msra.mxu0 0
        %1017 = vmatprep.subr.bf16.mxu0 0
        %1018 = vmatpush2.bf16.msra.mxu0 0
        %1019 = vmatprep.subr.bf16.mxu0 0
        %1020 = vmatpush2.bf16.msra.mxu0 0
        %1021 = vmatprep.subr.bf16.mxu0 0
        %1022 = vmatpush2.bf16.msra.mxu0 0
        %1023 = vmatprep.subr.bf16.mxu0 0
        %1024 = vmatpush2.bf16.msra.mxu0 0
        %1025 = vmatprep.subr.bf16.mxu0 0
        %1026 = vmatpush2.bf16.msra.mxu0 0
        %1027 = vmatprep.mubr.bf16.mxu0 0
        %1028 = vmatmul.mubr.bf16.gmra.mxu0 %v993
        %v1029 = vpop.f32.mrf.mxu0
        %v1030 = vadd.f32 %v979, %v1029
        %v1031 = vpop.f32.mrf.mxu0
        %v1032 = vpop.f32.mrf.mxu0
        %v1033 = vpop.f32.mrf.mxu0
        %1034 = vdwg.mxu0
        %v1035 = vpack.c.bf16 %v1030, %v1030
        %1036 = vst.msk [vmem:[%s412] sm:$0xf] %vm499, %v1035
        %s1037 = scalar_lea.vmem %s7, 16
        %v1038 = vld [vmem:[%s1037] sm:$0xf]
        %v1039 = vld [vmem:[%s1037 + $0x4] sm:$0xf]
        %v1040 = vld [vmem:[%s1037 + $0x8] sm:$0xf]
        %v1041 = vld [vmem:[%s1037 + $0xc] sm:$0xf]
        %s1042 = scalar_lea.vmem %s8, 1
        %v1043 = vld [vmem:[%s1042] sm:$0x1]
        %v1044 = vunpack.c.l.bf16 %v1043
        %v1045 = vlaneseq
        %v1046 = vshrl.u32 %v1045, 7
        %v1047 = vsub.s32 0, %v1046
        %v1048 = vrot.slane %v1044, %v1047
        %v1053 = vunpack.c.l.b16 %v1038
        %v1054 = vunpack.c.l.b16 %v1039
        %v1055 = vunpack.c.l.b16 %v1040
        %v1056 = vunpack.c.l.b16 %v1041
        %v1057 = vpack.c.b16 %v1054, %v1053
        %v1058 = vpack.c.b16 %v1056, %v1055
        %1061 = vmatprep.subr.bf16.mxu0 0
        %1062 = vmatpush1.bf16.msra.mxu0 0
        %1063 = vmatprep.subr.bf16.mxu0 0
        %1064 = vmatpush1.bf16.msra.mxu0 0
        %1065 = vmatprep.subr.bf16.mxu0 0
        %1066 = vmatpush1.bf16.msra.mxu0 0
        %1067 = vmatprep.subr.bf16.mxu0 0
        %1068 = vmatpush1.bf16.msra.mxu0 0
        %1069 = vmatprep.subr.bf16.mxu0 0
        %1070 = vmatpush1.bf16.msra.mxu0 0
        %1071 = vmatprep.subr.bf16.mxu0 0
        %1072 = vmatpush1.bf16.msra.mxu0 0
        %1073 = vmatprep.subr.bf16.mxu0 0
        %1074 = vmatpush1.bf16.msra.mxu0 %v1058
        %1075 = vmatprep.subr.bf16.mxu0 0
        %1076 = vmatpush1.bf16.msra.mxu0 %v1057
        %1077 = vmatprep.subr.bf16.mxu0 0
        %1078 = vmatpush2.bf16.msra.mxu0 0
        %1079 = vmatprep.subr.bf16.mxu0 0
        %1080 = vmatpush2.bf16.msra.mxu0 0
        %1081 = vmatprep.subr.bf16.mxu0 0
        %1082 = vmatpush2.bf16.msra.mxu0 0
        %1083 = vmatprep.subr.bf16.mxu0 0
        %1084 = vmatpush2.bf16.msra.mxu0 0
        %1085 = vmatprep.subr.bf16.mxu0 0
        %1086 = vmatpush2.bf16.msra.mxu0 0
        %1087 = vmatprep.subr.bf16.mxu0 0
        %1088 = vmatpush2.bf16.msra.mxu0 0
        %1089 = vmatprep.subr.bf16.mxu0 0
        %1090 = vmatpush2.bf16.msra.mxu0 0
        %1091 = vmatprep.subr.bf16.mxu0 0
        %1092 = vmatpush2.bf16.msra.mxu0 0
        %1093 = vmatprep.mubr.bf16.mxu0 0
        %1094 = vmatmul.mubr.bf16.gmra.mxu0 %v993
        %v1095 = vpop.f32.mrf.mxu0
        %v1096 = vadd.f32 %v1048, %v1095
        %v1097 = vpop.f32.mrf.mxu0
        %v1098 = vpop.f32.mrf.mxu0
        %v1099 = vpop.f32.mrf.mxu0
        %1100 = vdwg.mxu0
        %v1101 = vpack.c.bf16 %v1096, %v1096
        %s1102 = scalar_lea.vmem %s412, 4 [#allocation4]
        %1103 = vst.msk [vmem:[%s1102] sm:$0xf] %vm499, %v1101
        %s1104 = scalar_lea.vmem %s7, 32
        %v1105 = vld [vmem:[%s1104] sm:$0xf]
        %v1106 = vld [vmem:[%s1104 + $0x4] sm:$0xf]
        %v1107 = vld [vmem:[%s1104 + $0x8] sm:$0xf]
        %v1108 = vld [vmem:[%s1104 + $0xc] sm:$0xf]
        %s1109 = scalar_lea.vmem %s8, 2
        %v1110 = vld [vmem:[%s1109] sm:$0x1]
        %v1111 = vunpack.c.l.bf16 %v1110
        %v1112 = vlaneseq
        %v1113 = vshrl.u32 %v1112, 7
        %v1114 = vsub.s32 0, %v1113
        %v1115 = vrot.slane %v1111, %v1114
        %v1120 = vunpack.c.l.b16 %v1105
        %v1121 = vunpack.c.l.b16 %v1106
        %v1122 = vunpack.c.l.b16 %v1107
        %v1123 = vunpack.c.l.b16 %v1108
        %v1124 = vpack.c.b16 %v1121, %v1120
        %v1125 = vpack.c.b16 %v1123, %v1122
        %1128 = vmatprep.subr.bf16.mxu0 0
        %1129 = vmatpush1.bf16.msra.mxu0 0
        %1130 = vmatprep.subr.bf16.mxu0 0
        %1131 = vmatpush1.bf16.msra.mxu0 0
        %1132 = vmatprep.subr.bf16.mxu0 0
        %1133 = vmatpush1.bf16.msra.mxu0 0
        %1134 = vmatprep.subr.bf16.mxu0 0
        %1135 = vmatpush1.bf16.msra.mxu0 0
        %1136 = vmatprep.subr.bf16.mxu0 0
        %1137 = vmatpush1.bf16.msra.mxu0 0
        %1138 = vmatprep.subr.bf16.mxu0 0
        %1139 = vmatpush1.bf16.msra.mxu0 0
        %1140 = vmatprep.subr.bf16.mxu0 0
        %1141 = vmatpush1.bf16.msra.mxu0 %v1125
        %1142 = vmatprep.subr.bf16.mxu0 0
        %1143 = vmatpush1.bf16.msra.mxu0 %v1124
        %1144 = vmatprep.subr.bf16.mxu0 0
        %1145 = vmatpush2.bf16.msra.mxu0 0
        %1146 = vmatprep.subr.bf16.mxu0 0
        %1147 = vmatpush2.bf16.msra.mxu0 0
        %1148 = vmatprep.subr.bf16.mxu0 0
        %1149 = vmatpush2.bf16.msra.mxu0 0
        %1150 = vmatprep.subr.bf16.mxu0 0
        %1151 = vmatpush2.bf16.msra.mxu0 0
        %1152 = vmatprep.subr.bf16.mxu0 0
        %1153 = vmatpush2.bf16.msra.mxu0 0
        %1154 = vmatprep.subr.bf16.mxu0 0
        %1155 = vmatpush2.bf16.msra.mxu0 0
        %1156 = vmatprep.subr.bf16.mxu0 0
        %1157 = vmatpush2.bf16.msra.mxu0 0
        %1158 = vmatprep.subr.bf16.mxu0 0
        %1159 = vmatpush2.bf16.msra.mxu0 0
        %1160 = vmatprep.mubr.bf16.mxu0 0
        %1161 = vmatmul.mubr.bf16.gmra.mxu0 %v993
        %v1162 = vpop.f32.mrf.mxu0
        %v1163 = vadd.f32 %v1115, %v1162
        %v1164 = vpop.f32.mrf.mxu0
        %v1165 = vpop.f32.mrf.mxu0
        %v1166 = vpop.f32.mrf.mxu0
        %1167 = vdwg.mxu0
        %v1168 = vpack.c.bf16 %v1163, %v1163
        %s1169 = scalar_lea.vmem %s412, 8 [#allocation4]
        %1170 = vst.msk [vmem:[%s1169] sm:$0xf] %vm499, %v1168
        %s1171 = scalar_lea.vmem %s7, 48
        %v1172 = vld [vmem:[%s1171] sm:$0xf]
        %v1173 = vld [vmem:[%s1171 + $0x4] sm:$0xf]
        %v1174 = vld [vmem:[%s1171 + $0x8] sm:$0xf]
        %v1175 = vld [vmem:[%s1171 + $0xc] sm:$0xf]
        %s1176 = scalar_lea.vmem %s8, 3
        %v1177 = vld [vmem:[%s1176] sm:$0x1]
        %v1178 = vunpack.c.l.bf16 %v1177
        %v1179 = vlaneseq
        %v1180 = vshrl.u32 %v1179, 7
        %v1181 = vsub.s32 0, %v1180
        %v1182 = vrot.slane %v1178, %v1181
        %v1187 = vunpack.c.l.b16 %v1172
        %v1188 = vunpack.c.l.b16 %v1173
        %v1189 = vunpack.c.l.b16 %v1174
        %v1190 = vunpack.c.l.b16 %v1175
        %v1191 = vpack.c.b16 %v1188, %v1187
        %v1192 = vpack.c.b16 %v1190, %v1189
        %1195 = vmatprep.subr.bf16.mxu0 0
        %1196 = vmatpush1.bf16.msra.mxu0 0
        %1197 = vmatprep.subr.bf16.mxu0 0
        %1198 = vmatpush1.bf16.msra.mxu0 0
        %1199 = vmatprep.subr.bf16.mxu0 0
        %1200 = vmatpush1.bf16.msra.mxu0 0
        %1201 = vmatprep.subr.bf16.mxu0 0
        %1202 = vmatpush1.bf16.msra.mxu0 0
        %1203 = vmatprep.subr.bf16.mxu0 0
        %1204 = vmatpush1.bf16.msra.mxu0 0
        %1205 = vmatprep.subr.bf16.mxu0 0
        %1206 = vmatpush1.bf16.msra.mxu0 0
        %1207 = vmatprep.subr.bf16.mxu0 0
        %1208 = vmatpush1.bf16.msra.mxu0 %v1192
        %1209 = vmatprep.subr.bf16.mxu0 0
        %1210 = vmatpush1.bf16.msra.mxu0 %v1191
        %1211 = vmatprep.subr.bf16.mxu0 0
        %1212 = vmatpush2.bf16.msra.mxu0 0
        %1213 = vmatprep.subr.bf16.mxu0 0
        %1214 = vmatpush2.bf16.msra.mxu0 0
        %1215 = vmatprep.subr.bf16.mxu0 0
        %1216 = vmatpush2.bf16.msra.mxu0 0
        %1217 = vmatprep.subr.bf16.mxu0 0
        %1218 = vmatpush2.bf16.msra.mxu0 0
        %1219 = vmatprep.subr.bf16.mxu0 0
        %1220 = vmatpush2.bf16.msra.mxu0 0
        %1221 = vmatprep.subr.bf16.mxu0 0
        %1222 = vmatpush2.bf16.msra.mxu0 0
        %1223 = vmatprep.subr.bf16.mxu0 0
        %1224 = vmatpush2.bf16.msra.mxu0 0
        %1225 = vmatprep.subr.bf16.mxu0 0
        %1226 = vmatpush2.bf16.msra.mxu0 0
        %1227 = vmatprep.mubr.bf16.mxu0 0
        %1228 = vmatmul.mubr.bf16.gmra.mxu0 %v993
        %v1229 = vpop.f32.mrf.mxu0
        %v1230 = vadd.f32 %v1182, %v1229
        %v1231 = vpop.f32.mrf.mxu0
        %v1232 = vpop.f32.mrf.mxu0
        %v1233 = vpop.f32.mrf.mxu0
        %1234 = vdwg.mxu0
        %v1235 = vpack.c.bf16 %v1230, %v1230
        %s1236 = scalar_lea.vmem %s412, 12 [#allocation4]
        %1237 = vst.msk [vmem:[%s1236] sm:$0xf] %vm499, %v1235
        %s1238 = sand.u32 %s235, 1
        %s1239 = sand.u32 %s235, 1
        %s1240 = smul.addr %s1239, 16
        %s1241 = scalar_lea.vmem [#allocation2], %s1240
        %s1242 = sand.u32 %s261, 1
        %s1243 = sand.u32 %s261, 1
        %s1244 = smul.addr %s1243, 16
        %s1245 = scalar_lea.vmem [#allocation3], %s1244
        %s1246 = sand.u32 %s287, 1
        %s1247 = sand.u32 %s287, 1
        %s1248 = smul.addr %s1247, 16
        %s1249 = scalar_lea.vmem [#allocation4], %s1248
        // Predicated region
        $region57: #{tpu_custom_call.1} parent=55 // pred_check
          %p1250 = pneg %p245
        $region58: #{tpu_custom_call.1} parent=55 // pred_check_branch
          %1252 = sbr.rel (%p1250) target = $region60
        $region59: #{tpu_custom_call.1} parent=55 // pred_region
          %s1253 = smul.addr %s23, 4
          %s1254 = scalar_lea.vmem %s9, %s1253
          // Predicated region
          $region61: #{tpu_custom_call.1} parent=59 // pred_check
            _
          $region62: #{tpu_custom_call.1} parent=59 // pred_check_branch
            %1256 = sbr.rel (0) target = $region64
          $region63: #{tpu_custom_call.1} parent=59 // pred_region
            // Predicated region
            $region65: #{tpu_custom_call.1} parent=63 // pred_check
              _
            $region66: #{tpu_custom_call.1} parent=63 // pred_check_branch
              %1258 = sbr.rel target = $region68
            $region67: #{tpu_custom_call.1} parent=63 // pred_region
              // Predicated region
              $region80: #{tpu_custom_call.1} parent=67 // pred_check
                _
              $region81: #{tpu_custom_call.1} parent=67 // pred_check_branch
                %1280 = sbr.rel (0) target = $region83
              $region82: #{tpu_custom_call.1} parent=67 // pred_region
                loop: start=0, step=1, limit=1
                $region84: #{tpu_custom_call.1} parent=82 // loop_pre_header
                  _
                $region85: #{tpu_custom_call.1} parent=82 // loop_header
                  %s1282 = sphi 0, %s1286
                  %p1283 = scmp.ge.s32.totalorder %s1282, 1
                  %s1287 = sphi %s1241, %s1241
                  %s1288 = sphi %s1254, %s1254
                $region86: #{tpu_custom_call.1} parent=82 // loop_header_branch
                  %1285 = sbr.rel (%p1283) target = $region90
                $region87: #{tpu_custom_call.1} parent=82 // loop_body
                  _
                $region88: #{tpu_custom_call.1} parent=82 // loop_footer
                  %s1286 = sadd.s32 1, %s1282
                $region89: #{tpu_custom_call.1} parent=82 // loop_footer_branch
                  %1281 = sbr.rel target = $region85
                $region90: #{tpu_custom_call.1} parent=82 // loop_exit
                  _
                %s1290 = ssub.s32 16, 1
                loop: start=0, step=1, limit=1
                $region91: #{tpu_custom_call.1} parent=82 // loop_pre_header
                  _
                $region92: #{tpu_custom_call.1} parent=82 // loop_header
                  %s1292 = sphi 0, %s1296
                  %p1293 = scmp.ge.s32.totalorder %s1292, 1
                  %s1297 = sphi %s1241, %s1241
                  %s1298 = sphi %s1254, %s1254
                $region93: #{tpu_custom_call.1} parent=82 // loop_header_branch
                  %1295 = sbr.rel (%p1293) target = $region97
                $region94: #{tpu_custom_call.1} parent=82 // loop_body
                  %v1299 = vld [vmem:[%s1297] sm:%s1290]
                  %1300 = vst [vmem:[%s1298] sm:%s1290] %v1299
                  %v1301 = vld [vmem:[%s1297 + $0x4] sm:%s1290]
                  %1302 = vst [vmem:[%s1298 + $0x8] sm:%s1290] %v1301
                  %v1303 = vld [vmem:[%s1297 + $0x8] sm:%s1290]
                  %1304 = vst [vmem:[%s1298 + $0x10] sm:%s1290] %v1303
                  %v1305 = vld [vmem:[%s1297 + $0xc] sm:%s1290]
                  %1306 = vst [vmem:[%s1298 + $0x18] sm:%s1290] %v1305
                $region95: #{tpu_custom_call.1} parent=82 // loop_footer
                  %s1296 = sadd.s32 1, %s1292
                $region96: #{tpu_custom_call.1} parent=82 // loop_footer_branch
                  %1291 = sbr.rel target = $region92
                $region97: #{tpu_custom_call.1} parent=82 // loop_exit
                  _
              $region83: #{tpu_custom_call.1} parent=67 // pred_fallthru
                _
            $region68: #{tpu_custom_call.1} parent=63 // pred_fallthru
              _
            // Predicated region
            $region69: #{tpu_custom_call.1} parent=63 // pred_check
              _
            $region70: #{tpu_custom_call.1} parent=63 // pred_check_branch
              %1260 = sbr.rel (0) target = $region72
            $region71: #{tpu_custom_call.1} parent=63 // pred_region
              %s1262 = ssub.s32 16, 1
              loop: start=0, step=1, limit=1
              $region73: #{tpu_custom_call.1} parent=71 // loop_pre_header
                _
              $region74: #{tpu_custom_call.1} parent=71 // loop_header
                %s1264 = sphi 0, %s1268
                %p1265 = scmp.ge.s32.totalorder %s1264, 1
                %s1269 = sphi %s1241, %s1241
                %s1270 = sphi %s1254, %s1254
              $region75: #{tpu_custom_call.1} parent=71 // loop_header_branch
                %1267 = sbr.rel (%p1265) target = $region79
              $region76: #{tpu_custom_call.1} parent=71 // loop_body
                %v1271 = vld [vmem:[%s1269] sm:%s1262]
                %1272 = vst [vmem:[%s1270] sm:%s1262] %v1271
                %v1273 = vld [vmem:[%s1269 + $0x4] sm:%s1262]
                %1274 = vst [vmem:[%s1270 + $0x8] sm:%s1262] %v1273
                %v1275 = vld [vmem:[%s1269 + $0x8] sm:%s1262]
                %1276 = vst [vmem:[%s1270 + $0x10] sm:%s1262] %v1275
                %v1277 = vld [vmem:[%s1269 + $0xc] sm:%s1262]
                %1278 = vst [vmem:[%s1270 + $0x18] sm:%s1262] %v1277
              $region77: #{tpu_custom_call.1} parent=71 // loop_footer
                %s1268 = sadd.s32 1, %s1264
              $region78: #{tpu_custom_call.1} parent=71 // loop_footer_branch
                %1263 = sbr.rel target = $region74
              $region79: #{tpu_custom_call.1} parent=71 // loop_exit
                _
            $region72: #{tpu_custom_call.1} parent=63 // pred_fallthru
              _
          $region64: #{tpu_custom_call.1} parent=59 // pred_fallthru
            _
          %1307 = vnop
        $region60: #{tpu_custom_call.1} parent=55 // pred_fallthru
          _
        // Predicated region
        $region98: #{tpu_custom_call.1} parent=55 // pred_check
          %p1308 = pneg %p271
        $region99: #{tpu_custom_call.1} parent=55 // pred_check_branch
          %1310 = sbr.rel (%p1308) target = $region101
        $region100: #{tpu_custom_call.1} parent=55 // pred_region
          %s1311 = smul.addr %s23, 4
          %s1312 = scalar_lea.vmem %s10, %s1311
          // Predicated region
          $region102: #{tpu_custom_call.1} parent=100 // pred_check
            _
          $region103: #{tpu_custom_call.1} parent=100 // pred_check_branch
            %1314 = sbr.rel (0) target = $region105
          $region104: #{tpu_custom_call.1} parent=100 // pred_region
            // Predicated region
            $region106: #{tpu_custom_call.1} parent=104 // pred_check
              _
            $region107: #{tpu_custom_call.1} parent=104 // pred_check_branch
              %1316 = sbr.rel target = $region109
            $region108: #{tpu_custom_call.1} parent=104 // pred_region
              // Predicated region
              $region121: #{tpu_custom_call.1} parent=108 // pred_check
                _
              $region122: #{tpu_custom_call.1} parent=108 // pred_check_branch
                %1338 = sbr.rel (0) target = $region124
              $region123: #{tpu_custom_call.1} parent=108 // pred_region
                loop: start=0, step=1, limit=1
                $region125: #{tpu_custom_call.1} parent=123 // loop_pre_header
                  _
                $region126: #{tpu_custom_call.1} parent=123 // loop_header
                  %s1340 = sphi 0, %s1344
                  %p1341 = scmp.ge.s32.totalorder %s1340, 1
                  %s1345 = sphi %s1245, %s1245
                  %s1346 = sphi %s1312, %s1312
                $region127: #{tpu_custom_call.1} parent=123 // loop_header_branch
                  %1343 = sbr.rel (%p1341) target = $region131
                $region128: #{tpu_custom_call.1} parent=123 // loop_body
                  _
                $region129: #{tpu_custom_call.1} parent=123 // loop_footer
                  %s1344 = sadd.s32 1, %s1340
                $region130: #{tpu_custom_call.1} parent=123 // loop_footer_branch
                  %1339 = sbr.rel target = $region126
                $region131: #{tpu_custom_call.1} parent=123 // loop_exit
                  _
                %s1348 = ssub.s32 16, 1
                loop: start=0, step=1, limit=1
                $region132: #{tpu_custom_call.1} parent=123 // loop_pre_header
                  _
                $region133: #{tpu_custom_call.1} parent=123 // loop_header
                  %s1350 = sphi 0, %s1354
                  %p1351 = scmp.ge.s32.totalorder %s1350, 1
                  %s1355 = sphi %s1245, %s1245
                  %s1356 = sphi %s1312, %s1312
                $region134: #{tpu_custom_call.1} parent=123 // loop_header_branch
                  %1353 = sbr.rel (%p1351) target = $region138
                $region135: #{tpu_custom_call.1} parent=123 // loop_body
                  %v1357 = vld [vmem:[%s1355] sm:%s1348]
                  %1358 = vst [vmem:[%s1356] sm:%s1348] %v1357
                  %v1359 = vld [vmem:[%s1355 + $0x4] sm:%s1348]
                  %1360 = vst [vmem:[%s1356 + $0x8] sm:%s1348] %v1359
                  %v1361 = vld [vmem:[%s1355 + $0x8] sm:%s1348]
                  %1362 = vst [vmem:[%s1356 + $0x10] sm:%s1348] %v1361
                  %v1363 = vld [vmem:[%s1355 + $0xc] sm:%s1348]
                  %1364 = vst [vmem:[%s1356 + $0x18] sm:%s1348] %v1363
                $region136: #{tpu_custom_call.1} parent=123 // loop_footer
                  %s1354 = sadd.s32 1, %s1350
                $region137: #{tpu_custom_call.1} parent=123 // loop_footer_branch
                  %1349 = sbr.rel target = $region133
                $region138: #{tpu_custom_call.1} parent=123 // loop_exit
                  _
              $region124: #{tpu_custom_call.1} parent=108 // pred_fallthru
                _
            $region109: #{tpu_custom_call.1} parent=104 // pred_fallthru
              _
            // Predicated region
            $region110: #{tpu_custom_call.1} parent=104 // pred_check
              _
            $region111: #{tpu_custom_call.1} parent=104 // pred_check_branch
              %1318 = sbr.rel (0) target = $region113
            $region112: #{tpu_custom_call.1} parent=104 // pred_region
              %s1320 = ssub.s32 16, 1
              loop: start=0, step=1, limit=1
              $region114: #{tpu_custom_call.1} parent=112 // loop_pre_header
                _
              $region115: #{tpu_custom_call.1} parent=112 // loop_header
                %s1322 = sphi 0, %s1326
                %p1323 = scmp.ge.s32.totalorder %s1322, 1
                %s1327 = sphi %s1245, %s1245
                %s1328 = sphi %s1312, %s1312
              $region116: #{tpu_custom_call.1} parent=112 // loop_header_branch
                %1325 = sbr.rel (%p1323) target = $region120
              $region117: #{tpu_custom_call.1} parent=112 // loop_body
                %v1329 = vld [vmem:[%s1327] sm:%s1320]
                %1330 = vst [vmem:[%s1328] sm:%s1320] %v1329
                %v1331 = vld [vmem:[%s1327 + $0x4] sm:%s1320]
                %1332 = vst [vmem:[%s1328 + $0x8] sm:%s1320] %v1331
                %v1333 = vld [vmem:[%s1327 + $0x8] sm:%s1320]
                %1334 = vst [vmem:[%s1328 + $0x10] sm:%s1320] %v1333
                %v1335 = vld [vmem:[%s1327 + $0xc] sm:%s1320]
                %1336 = vst [vmem:[%s1328 + $0x18] sm:%s1320] %v1335
              $region118: #{tpu_custom_call.1} parent=112 // loop_footer
                %s1326 = sadd.s32 1, %s1322
              $region119: #{tpu_custom_call.1} parent=112 // loop_footer_branch
                %1321 = sbr.rel target = $region115
              $region120: #{tpu_custom_call.1} parent=112 // loop_exit
                _
            $region113: #{tpu_custom_call.1} parent=104 // pred_fallthru
              _
          $region105: #{tpu_custom_call.1} parent=100 // pred_fallthru
            _
          %1365 = vnop
        $region101: #{tpu_custom_call.1} parent=55 // pred_fallthru
          _
        // Predicated region
        $region139: #{tpu_custom_call.1} parent=55 // pred_check
          %p1366 = pneg %p297
        $region140: #{tpu_custom_call.1} parent=55 // pred_check_branch
          %1368 = sbr.rel (%p1366) target = $region142
        $region141: #{tpu_custom_call.1} parent=55 // pred_region
          %s1369 = smul.addr %s23, 4
          %s1370 = scalar_lea.vmem %s11, %s1369
          // Predicated region
          $region143: #{tpu_custom_call.1} parent=141 // pred_check
            _
          $region144: #{tpu_custom_call.1} parent=141 // pred_check_branch
            %1372 = sbr.rel (0) target = $region146
          $region145: #{tpu_custom_call.1} parent=141 // pred_region
            // Predicated region
            $region147: #{tpu_custom_call.1} parent=145 // pred_check
              _
            $region148: #{tpu_custom_call.1} parent=145 // pred_check_branch
              %1374 = sbr.rel target = $region150
            $region149: #{tpu_custom_call.1} parent=145 // pred_region
              // Predicated region
              $region162: #{tpu_custom_call.1} parent=149 // pred_check
                _
              $region163: #{tpu_custom_call.1} parent=149 // pred_check_branch
                %1396 = sbr.rel (0) target = $region165
              $region164: #{tpu_custom_call.1} parent=149 // pred_region
                loop: start=0, step=1, limit=1
                $region166: #{tpu_custom_call.1} parent=164 // loop_pre_header
                  _
                $region167: #{tpu_custom_call.1} parent=164 // loop_header
                  %s1398 = sphi 0, %s1402
                  %p1399 = scmp.ge.s32.totalorder %s1398, 1
                  %s1403 = sphi %s1249, %s1249
                  %s1404 = sphi %s1370, %s1370
                $region168: #{tpu_custom_call.1} parent=164 // loop_header_branch
                  %1401 = sbr.rel (%p1399) target = $region172
                $region169: #{tpu_custom_call.1} parent=164 // loop_body
                  _
                $region170: #{tpu_custom_call.1} parent=164 // loop_footer
                  %s1402 = sadd.s32 1, %s1398
                $region171: #{tpu_custom_call.1} parent=164 // loop_footer_branch
                  %1397 = sbr.rel target = $region167
                $region172: #{tpu_custom_call.1} parent=164 // loop_exit
                  _
                %s1406 = ssub.s32 16, 1
                loop: start=0, step=1, limit=1
                $region173: #{tpu_custom_call.1} parent=164 // loop_pre_header
                  _
                $region174: #{tpu_custom_call.1} parent=164 // loop_header
                  %s1408 = sphi 0, %s1412
                  %p1409 = scmp.ge.s32.totalorder %s1408, 1
                  %s1413 = sphi %s1249, %s1249
                  %s1414 = sphi %s1370, %s1370
                $region175: #{tpu_custom_call.1} parent=164 // loop_header_branch
                  %1411 = sbr.rel (%p1409) target = $region179
                $region176: #{tpu_custom_call.1} parent=164 // loop_body
                  %v1415 = vld [vmem:[%s1413] sm:%s1406]
                  %1416 = vst [vmem:[%s1414] sm:%s1406] %v1415
                  %v1417 = vld [vmem:[%s1413 + $0x4] sm:%s1406]
                  %1418 = vst [vmem:[%s1414 + $0x8] sm:%s1406] %v1417
                  %v1419 = vld [vmem:[%s1413 + $0x8] sm:%s1406]
                  %1420 = vst [vmem:[%s1414 + $0x10] sm:%s1406] %v1419
                  %v1421 = vld [vmem:[%s1413 + $0xc] sm:%s1406]
                  %1422 = vst [vmem:[%s1414 + $0x18] sm:%s1406] %v1421
                $region177: #{tpu_custom_call.1} parent=164 // loop_footer
                  %s1412 = sadd.s32 1, %s1408
                $region178: #{tpu_custom_call.1} parent=164 // loop_footer_branch
                  %1407 = sbr.rel target = $region174
                $region179: #{tpu_custom_call.1} parent=164 // loop_exit
                  _
              $region165: #{tpu_custom_call.1} parent=149 // pred_fallthru
                _
            $region150: #{tpu_custom_call.1} parent=145 // pred_fallthru
              _
            // Predicated region
            $region151: #{tpu_custom_call.1} parent=145 // pred_check
              _
            $region152: #{tpu_custom_call.1} parent=145 // pred_check_branch
              %1376 = sbr.rel (0) target = $region154
            $region153: #{tpu_custom_call.1} parent=145 // pred_region
              %s1378 = ssub.s32 16, 1
              loop: start=0, step=1, limit=1
              $region155: #{tpu_custom_call.1} parent=153 // loop_pre_header
                _
              $region156: #{tpu_custom_call.1} parent=153 // loop_header
                %s1380 = sphi 0, %s1384
                %p1381 = scmp.ge.s32.totalorder %s1380, 1
                %s1385 = sphi %s1249, %s1249
                %s1386 = sphi %s1370, %s1370
              $region157: #{tpu_custom_call.1} parent=153 // loop_header_branch
                %1383 = sbr.rel (%p1381) target = $region161
              $region158: #{tpu_custom_call.1} parent=153 // loop_body
                %v1387 = vld [vmem:[%s1385] sm:%s1378]
                %1388 = vst [vmem:[%s1386] sm:%s1378] %v1387
                %v1389 = vld [vmem:[%s1385 + $0x4] sm:%s1378]
                %1390 = vst [vmem:[%s1386 + $0x8] sm:%s1378] %v1389
                %v1391 = vld [vmem:[%s1385 + $0x8] sm:%s1378]
                %1392 = vst [vmem:[%s1386 + $0x10] sm:%s1378] %v1391
                %v1393 = vld [vmem:[%s1385 + $0xc] sm:%s1378]
                %1394 = vst [vmem:[%s1386 + $0x18] sm:%s1378] %v1393
              $region159: #{tpu_custom_call.1} parent=153 // loop_footer
                %s1384 = sadd.s32 1, %s1380
              $region160: #{tpu_custom_call.1} parent=153 // loop_footer_branch
                %1379 = sbr.rel target = $region156
              $region161: #{tpu_custom_call.1} parent=153 // loop_exit
                _
            $region154: #{tpu_custom_call.1} parent=145 // pred_fallthru
              _
          $region146: #{tpu_custom_call.1} parent=141 // pred_fallthru
            _
          %1423 = vnop
        $region142: #{tpu_custom_call.1} parent=55 // pred_fallthru
          _
      $region56: #{tpu_custom_call.1} parent=5 // pred_fallthru
        _
      %p1424 = scmp.le.s32.totalorder 2, %s18
      // Predicated region
      $region180: #{tpu_custom_call.1} parent=5 // pred_check
        %p1425 = pneg %p1424
      $region181: #{tpu_custom_call.1} parent=5 // pred_check_branch
        %1427 = sbr.rel (%p1425) target = $region183
      $region182: #{tpu_custom_call.1} parent=5 // pred_region
        %s1428 = ssub.s32 %s18, 2
        // Predicated region
        $region184: #{tpu_custom_call.1} parent=182 // pred_check
          %p1429 = pneg %p251
        $region185: #{tpu_custom_call.1} parent=182 // pred_check_branch
          %1431 = sbr.rel (%p1429) target = $region187
        $region186: #{tpu_custom_call.1} parent=182 // pred_region
          %s1432 = sand.u32 %s236, 1
          %s1433 = sand.u32 %s236, 1
          %s1434 = smul.addr %s1433, 16
          %s1435 = scalar_lea.vmem [#allocation2], %s1434
        $region187: #{tpu_custom_call.1} parent=182 // pred_fallthru
          _
        // Predicated region
        $region188: #{tpu_custom_call.1} parent=182 // pred_check
          %p1436 = pneg %p277
        $region189: #{tpu_custom_call.1} parent=182 // pred_check_branch
          %1438 = sbr.rel (%p1436) target = $region191
        $region190: #{tpu_custom_call.1} parent=182 // pred_region
          %s1439 = sand.u32 %s262, 1
          %s1440 = sand.u32 %s262, 1
          %s1441 = smul.addr %s1440, 16
          %s1442 = scalar_lea.vmem [#allocation3], %s1441
        $region191: #{tpu_custom_call.1} parent=182 // pred_fallthru
          _
        // Predicated region
        $region192: #{tpu_custom_call.1} parent=182 // pred_check
          %p1443 = pneg %p303
        $region193: #{tpu_custom_call.1} parent=182 // pred_check_branch
          %1445 = sbr.rel (%p1443) target = $region195
        $region194: #{tpu_custom_call.1} parent=182 // pred_region
          %s1446 = sand.u32 %s288, 1
          %s1447 = sand.u32 %s288, 1
          %s1448 = smul.addr %s1447, 16
          %s1449 = scalar_lea.vmem [#allocation4], %s1448
        $region195: #{tpu_custom_call.1} parent=182 // pred_fallthru
          _
      $region183: #{tpu_custom_call.1} parent=5 // pred_fallthru
        _
    $region6: #{tpu_custom_call.1} parent=1 // loop_footer
      %s22 = sadd.s32 1, %s18
    $region7: #{tpu_custom_call.1} parent=1 // loop_footer_branch
      %17 = sbr.rel target = $region3
    $region8: #{tpu_custom_call.1} parent=1 // loop_exit
      _

</llo_original>
